<compile_context>
chip_gen: v5e
topology: v5e:2x2
jax: 0.10.0
libtpu: 0.0.40
codegen_flags: <defaults>
</compile_context>

<pallas_src>
import functools

import jax
import jax.numpy as jnp
import numpy as np
from jax.experimental import pallas as pl
from jax.experimental.pallas import tpu as pltpu

EPS = 1e-5
SLOPE = 0.3                      # LeakyReLU negative slope
MXU_DTYPE = jnp.bfloat16         # MXU inputs + activation storage (f32 accum)


# ----------------------------------------------------------------------------
# Generation-dependent tuning
# ----------------------------------------------------------------------------
def _gen_config():
    kind = ""
    try:
        kind = getattr(jax.devices()[0], "device_kind", "").lower()
    except Exception:
        pass
    if "v5" in kind or "v6" in kind:
        # 128 MiB physical VMEM: bigger tiles + higher scoped-VMEM limit to
        # amortize the ~0.35us per-grid-step overhead.
        return {"vmem": 96 * 1024 * 1024, "max_tm": 1024, "max_ew_lanes": 16384}
    # v7x (64 MiB physical / 32 MiB scoped) and unknown: conservative budget.
    return {"vmem": 32 * 1024 * 1024, "max_tm": 512, "max_ew_lanes": 8192}


_GEN = _gen_config()


def _cparams():
    return pltpu.CompilerParams(
        dimension_semantics=("parallel",),
        vmem_limit_bytes=_GEN["vmem"],
    )


def _round_up(v, m):
    return ((v + m - 1) // m) * m


def _choose_tm(m, max_tm):
    # Lane-dense M tile (multiple of 128); aim for >=4 grid steps so v7x's two
    # TensorCores both get work and the double-buffer hides the A-tile DMA.
    tm = _round_up(-(-m // 4), 128)
    return int(max(128, min(max_tm, tm)))


def _choose_ew_tile(l, max_lanes):
    tl = _round_up(-(-l // 4), 128)
    return int(max(128, min(max_lanes, tl)))


def _pad_k(k):
    # Dense contraction dim: small K -> 128 multiple (negligible zero FLOPs),
    # large K -> bf16 sublane quantum.
    return _round_up(k, 128) if k <= 512 else _round_up(k, 16)


def _fold_rows(c, mp):
    """Fold a (C, Mp) slab to (C*g, Mp//g) (free row-major reshape) so the
    elementwise kernels use all 8 sublanes per vreg when C < 8."""
    if c >= 8:
        return 1
    g = 8 // c
    while g > 1 and not (mp % g == 0 and (mp // g) % 128 == 0):
        g //= 2
    return g


# ----------------------------------------------------------------------------
# Pallas kernels: lane-dense conv matmul (bias-free) + fused BN statistics
# ----------------------------------------------------------------------------
def _emit_stats(acc, s_ref):
    # acc: (Cout, TM) f32.  Store per-channel (sum, sum_sq) lane-replicated
    # across 128 lanes so the stats store is unmasked in the lane direction.
    rep = s_ref.shape[2:]                                  # (Cout, 128)
    s_ref[0, 0] = jnp.broadcast_to(jnp.sum(acc, axis=-1, keepdims=True), rep)
    s_ref[0, 1] = jnp.broadcast_to(jnp.sum(acc * acc, axis=-1, keepdims=True), rep)


def _conv_stats_kernel(w_ref, a_ref, o_ref, s_ref):
    acc = jnp.dot(w_ref[...], a_ref[...], preferred_element_type=jnp.float32)
    o_ref[...] = acc.astype(o_ref.dtype)                   # bf16 activation slab
    _emit_stats(acc, s_ref)


def _conv_pair_stats_kernel(w1_ref, a1_ref, w2_ref, a2_ref,
                            o1_ref, o2_ref, s1_ref, s2_ref):
    acc1 = jnp.dot(w1_ref[...], a1_ref[...], preferred_element_type=jnp.float32)
    acc2 = jnp.dot(w2_ref[...], a2_ref[...], preferred_element_type=jnp.float32)
    o1_ref[...] = acc1.astype(o1_ref.dtype)
    o2_ref[...] = acc2.astype(o2_ref.dtype)
    _emit_stats(acc1, s1_ref)
    _emit_stats(acc2, s2_ref)


def conv_stats(a, wmat):
    """Bias-free conv as lane-dense matmul with fused per-tile BN statistics.
    a: (K, M) bf16 patch matrix, wmat: (Cout, K).
    Returns (out (Cout, Mp) bf16, stats (T, 2, Cout, 128) f32, tm)."""
    K, M = a.shape
    Cout = wmat.shape[0]
    tm = _choose_tm(M, _GEN["max_tm"])
    Mp, Kp = _round_up(M, tm), _pad_k(K)
    a = jnp.pad(a.astype(MXU_DTYPE), ((0, Kp - K), (0, Mp - M)))
    w = jnp.pad(wmat.astype(MXU_DTYPE), ((0, 0), (0, Kp - K)))
    T = Mp // tm
    cost = pl.CostEstimate(
        flops=2 * Cout * Kp * Mp, transcendentals=0,
        bytes_accessed=(a.size + w.size + Cout * Mp) * 2 + T * 2 * Cout * 128 * 4)
    out, stats = pl.pallas_call(
        _conv_stats_kernel,
        out_shape=(jax.ShapeDtypeStruct((Cout, Mp), MXU_DTYPE),
                   jax.ShapeDtypeStruct((T, 2, Cout, 128), jnp.float32)),
        grid=(T,),
        in_specs=[pl.BlockSpec((Cout, Kp), lambda i: (0, 0)),
                  pl.BlockSpec((Kp, tm), lambda i: (0, i))],
        out_specs=(pl.BlockSpec((Cout, tm), lambda i: (0, i)),
                   pl.BlockSpec((1, 2, Cout, 128), lambda i: (i, 0, 0, 0))),
        compiler_params=_cparams(),
        cost_estimate=cost,
    )(w, a)
    return out, stats, tm


def conv_pair_stats(a1, w1m, a2, w2m):
    """conv1 (main) and conv2 (skip) share one launch: same M grid, same Cout."""
    K1, M = a1.shape
    K2 = a2.shape[0]
    Cout = w1m.shape[0]
    tm = _choose_tm(M, _GEN["max_tm"])
    Mp = _round_up(M, tm)
    Kp1, Kp2 = _pad_k(K1), _pad_k(K2)
    a1 = jnp.pad(a1.astype(MXU_DTYPE), ((0, Kp1 - K1), (0, Mp - M)))
    a2 = jnp.pad(a2.astype(MXU_DTYPE), ((0, Kp2 - K2), (0, Mp - M)))
    w1 = jnp.pad(w1m.astype(MXU_DTYPE), ((0, 0), (0, Kp1 - K1)))
    w2 = jnp.pad(w2m.astype(MXU_DTYPE), ((0, 0), (0, Kp2 - K2)))
    T = Mp // tm
    cost = pl.CostEstimate(
        flops=2 * Cout * (Kp1 + Kp2) * Mp, transcendentals=0,
        bytes_accessed=(a1.size + a2.size + w1.size + w2.size + 2 * Cout * Mp) * 2
        + 2 * T * 2 * Cout * 128 * 4)
    o1, o2, s1, s2 = pl.pallas_call(
        _conv_pair_stats_kernel,
        out_shape=(jax.ShapeDtypeStruct((Cout, Mp), MXU_DTYPE),
                   jax.ShapeDtypeStruct((Cout, Mp), MXU_DTYPE),
                   jax.ShapeDtypeStruct((T, 2, Cout, 128), jnp.float32),
                   jax.ShapeDtypeStruct((T, 2, Cout, 128), jnp.float32)),
        grid=(T,),
        in_specs=[pl.BlockSpec((Cout, Kp1), lambda i: (0, 0)),
                  pl.BlockSpec((Kp1, tm), lambda i: (0, i)),
                  pl.BlockSpec((Cout, Kp2), lambda i: (0, 0)),
                  pl.BlockSpec((Kp2, tm), lambda i: (0, i))],
        out_specs=(pl.BlockSpec((Cout, tm), lambda i: (0, i)),
                   pl.BlockSpec((Cout, tm), lambda i: (0, i)),
                   pl.BlockSpec((1, 2, Cout, 128), lambda i: (i, 0, 0, 0)),
                   pl.BlockSpec((1, 2, Cout, 128), lambda i: (i, 0, 0, 0))),
        compiler_params=_cparams(),
        cost_estimate=cost,
    )(w1, a1, w2, a2)
    return o1, o2, s1, s2, tm


# ----------------------------------------------------------------------------
# Pallas kernels: lane-dense BN-apply / LeakyReLU / residual add
# ----------------------------------------------------------------------------
def _norm_act_kernel(x_ref, a_ref, b_ref, o_ref):
    y = x_ref[...].astype(jnp.float32) * a_ref[...] + b_ref[...]
    o_ref[...] = jnp.maximum(y, SLOPE * y).astype(o_ref.dtype)   # LeakyReLU(0.3)


def _tail_kernel(x_ref, y_ref, ax_ref, ay_ref, b_ref, o_ref):
    z = (x_ref[...].astype(jnp.float32) * ax_ref[...]
         + y_ref[...].astype(jnp.float32) * ay_ref[...] + b_ref[...])
    o_ref[...] = jnp.maximum(z, SLOPE * z).astype(o_ref.dtype)


def norm_act(x_mat, scale, shift, out_dtype=jnp.float32):
    C, Mp = x_mat.shape
    g = _fold_rows(C, Mp)
    R, L = C * g, Mp // g
    xv = x_mat.reshape(R, L)
    a = jnp.repeat(scale.astype(jnp.float32), g).reshape(R, 1)
    b = jnp.repeat(shift.astype(jnp.float32), g).reshape(R, 1)
    tl = _choose_ew_tile(L, _GEN["max_ew_lanes"])
    out = pl.pallas_call(
        _norm_act_kernel,
        out_shape=jax.ShapeDtypeStruct((R, L), out_dtype),
        grid=(pl.cdiv(L, tl),),
        in_specs=[pl.BlockSpec((R, tl), lambda i: (0, i)),
                  pl.BlockSpec((R, 1), lambda i: (0, 0)),
                  pl.BlockSpec((R, 1), lambda i: (0, 0))],
        out_specs=pl.BlockSpec((R, tl), lambda i: (0, i)),
        compiler_params=_cparams(),
    )(xv, a, b)
    return out.reshape(C, Mp)


def tail_norm_add_act(x_mat, y_mat, scale_x, scale_y, shift_sum,
                      out_dtype=jnp.float32):
    C, Mp = x_mat.shape
    g = _fold_rows(C, Mp)
    R, L = C * g, Mp // g
    xv, yv = x_mat.reshape(R, L), y_mat.reshape(R, L)
    ax = jnp.repeat(scale_x.astype(jnp.float32), g).reshape(R, 1)
    ay = jnp.repeat(scale_y.astype(jnp.float32), g).reshape(R, 1)
    b = jnp.repeat(shift_sum.astype(jnp.float32), g).reshape(R, 1)
    tl = _choose_ew_tile(L, _GEN["max_ew_lanes"])
    out = pl.pallas_call(
        _tail_kernel,
        out_shape=jax.ShapeDtypeStruct((R, L), out_dtype),
        grid=(pl.cdiv(L, tl),),
        in_specs=[pl.BlockSpec((R, tl), lambda i: (0, i)),
                  pl.BlockSpec((R, tl), lambda i: (0, i)),
                  pl.BlockSpec((R, 1), lambda i: (0, 0)),
                  pl.BlockSpec((R, 1), lambda i: (0, 0)),
                  pl.BlockSpec((R, 1), lambda i: (0, 0))],
        out_specs=pl.BlockSpec((R, tl), lambda i: (0, i)),
        compiler_params=_cparams(),
    )(xv, yv, ax, ay, b)
    return out.reshape(C, Mp)


# ----------------------------------------------------------------------------
# Plain-JAX layout glue: channel-first patches, weight reshape, BN finalize
# ----------------------------------------------------------------------------
def _patches_cf(xp, KH, KW, sh, sw):
    """xp: (C, N, Hp, Wp), already padded.  VALID-conv patch matrix in
    channel-first order: rows = (kh, kw, c), columns = (n, oh, ow)."""
    C, N, Hp, Wp = xp.shape
    OH = (Hp - KH) // sh + 1
    OW = (Wp - KW) // sw + 1
    taps = [xp[:, :, kh:kh + sh * OH:sh, kw:kw + sw * OW:sw].reshape(C, N * OH * OW)
            for kh in range(KH) for kw in range(KW)]
    return jnp.concatenate(taps, axis=0), (OH, OW)


def _w2mat(w):
    # (Cout, Cin, KH, KW) -> (Cout, KH*KW*Cin), matching the patch row order.
    Cout = w.shape[0]
    return jnp.transpose(w, (0, 2, 3, 1)).reshape(Cout, -1)


def _bn_affine(stats, m_true, tm, gamma, beta):
    """stats: (T, 2, C, 128) lane-replicated per-tile (sum, sum_sq) of the
    bias-free conv output.  Training-mode BN affine via a Chan-style
    per-tile-centered combine (better conditioned than global E[x^2]-E[x]^2)
    with a var>=0 clamp."""
    t = stats.shape[0]
    sum_t = stats[:, 0, :, 0]                               # (T, C)
    sq_t = stats[:, 1, :, 0]                                # (T, C)
    counts = jnp.clip(m_true - jnp.arange(t) * tm, 0, tm).astype(jnp.float32)[:, None]
    safe = jnp.maximum(counts, 1.0)
    mean_t = sum_t / safe
    m2_t = jnp.maximum(sq_t - sum_t * mean_t, 0.0)
    mean = jnp.sum(sum_t, axis=0) / m_true
    m2 = jnp.sum(m2_t + counts * (mean_t - mean[None, :]) ** 2, axis=0)
    var = jnp.maximum(m2 / m_true, 0.0)
    scale = gamma * jax.lax.rsqrt(var + EPS)
    shift = beta - mean * scale
    return scale, shift


# ----------------------------------------------------------------------------
# ResNet2d forward
# ----------------------------------------------------------------------------
def resnet2d_forward(x_nchw, p, stride):
    s0, s1 = stride
    # Channel-first (C, N, H, W) bf16 layout: conv outputs (Cout, M) are
    # lane-dense and feed the next patch build with no transposes.
    x_cf = jnp.transpose(x_nchw, (1, 0, 2, 3)).astype(MXU_DTYPE)
    C, N, H, W = x_cf.shape
    M0 = N * H * W

    # conv0 (3x3 "same") with fused BN0 stats, then BN0-apply + LeakyReLU.
    # NOTE: conv biases are omitted in the Pallas path — training-mode BN's
    # batch-mean subtraction cancels a per-channel constant exactly.
    a0, _ = _patches_cf(jnp.pad(x_cf, ((0, 0), (0, 0), (1, 1), (1, 1))), 3, 3, 1, 1)
    h_mat, st0, tm0 = conv_stats(a0, _w2mat(p["w0"]))
    sc0, sh0 = _bn_affine(st0, M0, tm0, p["g0"], p["be0"])
    h_mat = norm_act(h_mat, sc0, sh0, out_dtype=MXU_DTYPE)          # bf16
    h_cf = h_mat[:, :M0].reshape(C, N, H, W)

    # ReflectionPad2d([(s1+1)//2, (s1+2)//2, (s0+1)//2, (s0+2)//2])
    top, bottom = (s0 + 1) // 2, (s0 + 2) // 2
    left, right = (s1 + 1) // 2, (s1 + 2) // 2
    hp = jnp.pad(h_cf, ((0, 0), (0, 0), (top, bottom), (left, right)),
                 mode="reflect")

    # conv1 (main, (s0+2)x(s1+2), stride) and conv2 (skip, 1x1, stride) share
    # one launch (same M grid, same Cout).
    a1, (OH, OW) = _patches_cf(hp, s0 + 2, s1 + 2, s0, s1)
    a2 = x_cf[:, :, ::s0, ::s1].reshape(C, -1)
    M1 = N * OH * OW
    x1_mat, y_mat, st1, st2, tm1 = conv_pair_stats(
        a1, _w2mat(p["w1"]), a2, _w2mat(p["w2"]))
    sc1, sh1 = _bn_affine(st1, M1, tm1, p["g1"], p["be1"])
    sc2, sh2 = _bn_affine(st2, M1, tm1, p["g2"], p["be2"])

    # fused: bn1(conv1) + bn2(conv2) -> LeakyReLU (final output in f32)
    out_mat = tail_norm_add_act(x1_mat, y_mat, sc1, sc2, sh1 + sh2,
                                out_dtype=jnp.float32)
    Cf = out_mat.shape[0]
    out = out_mat[:, :M1].reshape(Cf, N, OH, OW)
    return jnp.transpose(out, (1, 0, 2, 3))                          # NCHW


# ----------------------------------------------------------------------------
# Pure-JAX reference (full PyTorch semantics, incl. conv biases) for validation
# ----------------------------------------------------------------------------
def ref_forward(x, p, stride):
    def conv(x, w, b, st, pad):
        out = jax.lax.conv_general_dilated(
            x, w, window_strides=st, padding=pad,
            dimension_numbers=("NCHW", "OIHW", "NCHW"))
        return out + b.reshape(1, -1, 1, 1)

    def bn(x, g, be):
        mean = jnp.mean(x, axis=(0, 2, 3), keepdims=True)
        var = jnp.mean((x - mean) ** 2, axis=(0, 2, 3), keepdims=True)
        return (x - mean) * jax.lax.rsqrt(var + EPS) * g.reshape(1, -1, 1, 1) \
            + be.reshape(1, -1, 1, 1)

    def act(x):
        return jnp.where(x >= 0, x, SLOPE * x)

    s0, s1 = stride
    h = act(bn(conv(x, p["w0"], p["b0"], (1, 1), "SAME"), p["g0"], p["be0"]))
    hp = jnp.pad(
        h,
        ((0, 0), (0, 0), ((s0 + 1) // 2, (s0 + 2) // 2), ((s1 + 1) // 2, (s1 + 2) // 2)),
        mode="reflect")
    x1 = bn(conv(hp, p["w1"], p["b1"], stride, "VALID"), p["g1"], p["be1"])
    y = bn(conv(x, p["w2"], p["b2"], stride, "VALID"), p["g2"], p["be2"])
    return act(x1 + y)


# ----------------------------------------------------------------------------
def init_params(key, n_channels, factor, stride):
    s0, s1 = stride
    c, cf = n_channels, factor * n_channels
    ks = jax.random.split(key, 12)
    return {
        "w0": 0.1 * jax.random.normal(ks[0], (c, c, 3, 3), jnp.float32),
        "b0": 0.1 * jax.random.normal(ks[1], (c,), jnp.float32),
        "w1": 0.1 * jax.random.normal(ks[2], (cf, c, s0 + 2, s1 + 2), jnp.float32),
        "b1": 0.1 * jax.random.normal(ks[3], (cf,), jnp.float32),
        "w2": 0.1 * jax.random.normal(ks[4], (cf, c, 1, 1), jnp.float32),
        "b2": 0.1 * jax.random.normal(ks[5], (cf,), jnp.float32),
        "g0": 1.0 + 0.1 * jax.random.normal(ks[6], (c,), jnp.float32),
        "be0": 0.1 * jax.random.normal(ks[7], (c,), jnp.float32),
        "g1": 1.0 + 0.1 * jax.random.normal(ks[8], (cf,), jnp.float32),
        "be1": 0.1 * jax.random.normal(ks[9], (cf,), jnp.float32),
        "g2": 1.0 + 0.1 * jax.random.normal(ks[10], (cf,), jnp.float32),
        "be2": 0.1 * jax.random.normal(ks[11], (cf,), jnp.float32),
    }


if __name__ == "__main__":
    key = jax.random.PRNGKey(0)
    k_x, k_p = jax.random.split(key)

    n_channels, factor, stride = 4, 2, (2, 2)
    x = jax.random.normal(k_x, (2, n_channels, 16, 16), jnp.float32)  # NCHW
    params = init_params(k_p, n_channels, factor, stride)

    fwd = jax.jit(functools.partial(resnet2d_forward, stride=stride))
    out = jax.block_until_ready(fwd(x, params))

    ref = jax.block_until_ready(ref_forward(x, params, stride))
    # Tolerance accounts for bf16 MXU inputs and bf16 storage of the
    # intermediate activation slabs (f32 accumulation / f32 BN statistics);
    # the f32 reference models full PyTorch semantics incl. conv biases.
    np.testing.assert_allclose(np.asarray(out), np.asarray(ref),
                               rtol=3e-2, atol=3e-2)

    assert out.shape == (2, factor * n_channels, 8, 8)
    print("KERNEL_OK")
</pallas_src>

<mosaic_0001>
module attributes {stable_mosaic.version = 11 : i64} {
  func.func @_conv_stats_kernel(%arg0: i32, %arg1: memref<4x128xbf16, #tpu.memory_space<vmem>>, %arg2: memref<128x128xbf16, #tpu.memory_space<vmem>>, %arg3: memref<4x128xbf16, #tpu.memory_space<vmem>>, %arg4: memref<1x2x4x128xf32, #tpu.memory_space<vmem>>) attributes {dimension_semantics = [#tpu.dimension_semantics<parallel>], iteration_bounds = array<i64: 4>, scalar_prefetch = 0 : i64, scratch_operands = 0 : i64, tpu.core_type = #tpu.core_type<tc>, window_params = [{pipeline_mode = #tpu.pipeline_mode<synchronous>, transform_indices = @transform_0, window_bounds = array<i64: 4, 128>}, {transform_indices = @transform_1, window_bounds = array<i64: 128, 128>}, {transform_indices = @transform_2, window_bounds = array<i64: 4, 128>}, {transform_indices = @transform_3, window_bounds = array<i64: 1, 2, 4, 128>}]} {
    %c0 = arith.constant 0 : index
    %c0_0 = arith.constant 0 : index
    %0 = vector.load %arg1[%c0, %c0_0] : memref<4x128xbf16, #tpu.memory_space<vmem>>, vector<4x128xbf16>
    %c0_1 = arith.constant 0 : index
    %c0_2 = arith.constant 0 : index
    %1 = vector.load %arg2[%c0_1, %c0_2] : memref<128x128xbf16, #tpu.memory_space<vmem>>, vector<128x128xbf16>
    %cst = arith.constant dense<0.000000e+00> : vector<4x128xf32>
    %2 = tpu.matmul %0, %1, %cst {dimension_numbers = #tpu.dot_dimension_numbers<[1], [0], [0], [1], [0, 0, 1, 1], [], []>} : vector<4x128xbf16>, vector<128x128xbf16>, vector<4x128xf32> -> vector<4x128xf32>
    %3 = arith.truncf %2 : vector<4x128xf32> to vector<4x128xbf16>
    %c0_3 = arith.constant 0 : index
    %c0_4 = arith.constant 0 : index
    %4 = vector.load %arg3[%c0_3, %c0_4] : memref<4x128xbf16, #tpu.memory_space<vmem>>, vector<4x128xbf16>
    tpu.vector_store %arg3[%c0_3, %c0_4], %3 {strides = array<i32>} : memref<4x128xbf16, #tpu.memory_space<vmem>>, vector<4x128xbf16>,
    %cst_5 = arith.constant dense<0.000000e+00> : vector<4xf32>
    %5 = vector.multi_reduction <add>, %2, %cst_5 [1] : vector<4x128xf32> to vector<4xf32>
    %6 = vector.shape_cast %5 : vector<4xf32> to vector<4x1xf32>
    %7 = vector.shape_cast %6 : vector<4x1xf32> to vector<4x1xf32>
    %8 = vector.broadcast %7 : vector<4x1xf32> to vector<4x128xf32>
    %c0_6 = arith.constant 0 : index
    %c0_7 = arith.constant 0 : index
    %c0_8 = arith.constant 0 : index
    %c0_9 = arith.constant 0 : index
    %9 = vector.load %arg4[%c0_6, %c0_7, %c0_8, %c0_9] : memref<1x2x4x128xf32, #tpu.memory_space<vmem>>, vector<1x1x4x128xf32>
    %10 = vector.shape_cast %9 : vector<1x1x4x128xf32> to vector<4x128xf32>
    %11 = vector.shape_cast %8 : vector<4x128xf32> to vector<1x1x4x128xf32>
    tpu.vector_store %arg4[%c0_6, %c0_7, %c0_8, %c0_9], %11 {strides = array<i32>} : memref<1x2x4x128xf32, #tpu.memory_space<vmem>>, vector<1x1x4x128xf32>,
    %12 = arith.mulf %2, %2 : vector<4x128xf32>
    %cst_10 = arith.constant dense<0.000000e+00> : vector<4xf32>
    %13 = vector.multi_reduction <add>, %12, %cst_10 [1] : vector<4x128xf32> to vector<4xf32>
    %14 = vector.shape_cast %13 : vector<4xf32> to vector<4x1xf32>
    %15 = vector.shape_cast %14 : vector<4x1xf32> to vector<4x1xf32>
    %16 = vector.broadcast %15 : vector<4x1xf32> to vector<4x128xf32>
    %c0_11 = arith.constant 0 : index
    %c1 = arith.constant 1 : index
    %c0_12 = arith.constant 0 : index
    %c0_13 = arith.constant 0 : index
    %17 = vector.load %arg4[%c0_11, %c1, %c0_12, %c0_13] : memref<1x2x4x128xf32, #tpu.memory_space<vmem>>, vector<1x1x4x128xf32>
    %18 = vector.shape_cast %17 : vector<1x1x4x128xf32> to vector<4x128xf32>
    %19 = vector.shape_cast %16 : vector<4x128xf32> to vector<1x1x4x128xf32>
    tpu.vector_store %arg4[%c0_11, %c1, %c0_12, %c0_13], %19 {strides = array<i32>} : memref<1x2x4x128xf32, #tpu.memory_space<vmem>>, vector<1x1x4x128xf32>,
    return
  }
  func.func @transform_0(%arg0: i32) -> (i32, i32) {
    %c0_i32 = arith.constant 0 : i32
    %c0_i32_0 = arith.constant 0 : i32
    %c0_i32_1 = arith.constant 0 : i32
    return %c0_i32, %c0_i32_0 : i32, i32
  }
  func.func @transform_1(%arg0: i32) -> (i32, i32) {
    %c0_i32 = arith.constant 0 : i32
    %c0_i32_0 = arith.constant 0 : i32
    return %c0_i32, %arg0 : i32, i32
  }
  func.func @transform_2(%arg0: i32) -> (i32, i32) {
    %c0_i32 = arith.constant 0 : i32
    %c0_i32_0 = arith.constant 0 : i32
    return %c0_i32, %arg0 : i32, i32
  }
  func.func @transform_3(%arg0: i32) -> (i32, i32, i32, i32) {
    %c0_i32 = arith.constant 0 : i32
    %c0_i32_0 = arith.constant 0 : i32
    %c0_i32_1 = arith.constant 0 : i32
    %c0_i32_2 = arith.constant 0 : i32
    return %arg0, %c0_i32, %c0_i32_0, %c0_i32_1 : i32, i32, i32, i32
  }
}

module attributes {stable_mosaic.version = 11 : i64} {
  func.func @_norm_act_kernel(%arg0: i32, %arg1: memref<8x128xbf16, #tpu.memory_space<vmem>>, %arg2: memref<8x1xf32, #tpu.memory_space<vmem>>, %arg3: memref<8x1xf32, #tpu.memory_space<vmem>>, %arg4: memref<8x128xbf16, #tpu.memory_space<vmem>>) attributes {dimension_semantics = [#tpu.dimension_semantics<parallel>], iteration_bounds = array<i64: 2>, scalar_prefetch = 0 : i64, scratch_operands = 0 : i64, tpu.core_type = #tpu.core_type<tc>, window_params = [{transform_indices = @transform_0, window_bounds = array<i64: 8, 128>}, {pipeline_mode = #tpu.pipeline_mode<synchronous>, transform_indices = @transform_1, window_bounds = array<i64: 8, 1>}, {pipeline_mode = #tpu.pipeline_mode<synchronous>, transform_indices = @transform_2, window_bounds = array<i64: 8, 1>}, {transform_indices = @transform_3, window_bounds = array<i64: 8, 128>}]} {
    %c0 = arith.constant 0 : index
    %c0_0 = arith.constant 0 : index
    %0 = vector.load %arg1[%c0, %c0_0] : memref<8x128xbf16, #tpu.memory_space<vmem>>, vector<8x128xbf16>
    %1 = arith.extf %0 : vector<8x128xbf16> to vector<8x128xf32>
    %c0_1 = arith.constant 0 : index
    %c0_2 = arith.constant 0 : index
    %2 = vector.load %arg2[%c0_1, %c0_2] : memref<8x1xf32, #tpu.memory_space<vmem>>, vector<8x1xf32>
    %3 = vector.broadcast %2 : vector<8x1xf32> to vector<8x128xf32>
    %4 = arith.mulf %1, %3 : vector<8x128xf32>
    %c0_3 = arith.constant 0 : index
    %c0_4 = arith.constant 0 : index
    %5 = vector.load %arg3[%c0_3, %c0_4] : memref<8x1xf32, #tpu.memory_space<vmem>>, vector<8x1xf32>
    %6 = vector.broadcast %5 : vector<8x1xf32> to vector<8x128xf32>
    %7 = arith.addf %4, %6 : vector<8x128xf32>
    %cst = arith.constant 3.000000e-01 : f32
    %8 = vector.broadcast %cst : f32 to vector<8x128xf32>
    %9 = arith.mulf %8, %7 : vector<8x128xf32>
    %10 = arith.maximumf %7, %9 : vector<8x128xf32>
    %11 = arith.truncf %10 : vector<8x128xf32> to vector<8x128xbf16>
    %c0_5 = arith.constant 0 : index
    %c0_6 = arith.constant 0 : index
    %12 = vector.load %arg4[%c0_5, %c0_6] : memref<8x128xbf16, #tpu.memory_space<vmem>>, vector<8x128xbf16>
    tpu.vector_store %arg4[%c0_5, %c0_6], %11 {strides = array<i32>} : memref<8x128xbf16, #tpu.memory_space<vmem>>, vector<8x128xbf16>,
    return
  }
  func.func @transform_0(%arg0: i32) -> (i32, i32) {
    %c0_i32 = arith.constant 0 : i32
    %c0_i32_0 = arith.constant 0 : i32
    return %c0_i32, %arg0 : i32, i32
  }
  func.func @transform_1(%arg0: i32) -> (i32, i32) {
    %c0_i32 = arith.constant 0 : i32
    %c0_i32_0 = arith.constant 0 : i32
    %c0_i32_1 = arith.constant 0 : i32
    return %c0_i32, %c0_i32_0 : i32, i32
  }
  func.func @transform_2(%arg0: i32) -> (i32, i32) {
    %c0_i32 = arith.constant 0 : i32
    %c0_i32_0 = arith.constant 0 : i32
    %c0_i32_1 = arith.constant 0 : i32
    return %c0_i32, %c0_i32_0 : i32, i32
  }
  func.func @transform_3(%arg0: i32) -> (i32, i32) {
    %c0_i32 = arith.constant 0 : i32
    %c0_i32_0 = arith.constant 0 : i32
    return %c0_i32, %arg0 : i32, i32
  }
}

module attributes {stable_mosaic.version = 11 : i64} {
  func.func @_conv_pair_stats_kernel(%arg0: i32, %arg1: memref<8x128xbf16, #tpu.memory_space<vmem>>, %arg2: memref<128x128xbf16, #tpu.memory_space<vmem>>, %arg3: memref<8x128xbf16, #tpu.memory_space<vmem>>, %arg4: memref<128x128xbf16, #tpu.memory_space<vmem>>, %arg5: memref<8x128xbf16, #tpu.memory_space<vmem>>, %arg6: memref<8x128xbf16, #tpu.memory_space<vmem>>, %arg7: memref<1x2x8x128xf32, #tpu.memory_space<vmem>>, %arg8: memref<1x2x8x128xf32, #tpu.memory_space<vmem>>) attributes {dimension_semantics = [#tpu.dimension_semantics<parallel>], iteration_bounds = array<i64: 1>, scalar_prefetch = 0 : i64, scratch_operands = 0 : i64, tpu.core_type = #tpu.core_type<tc>, window_params = [{pipeline_mode = #tpu.pipeline_mode<synchronous>, transform_indices = @transform_0, window_bounds = array<i64: 8, 128>}, {transform_indices = @transform_1, window_bounds = array<i64: 128, 128>}, {pipeline_mode = #tpu.pipeline_mode<synchronous>, transform_indices = @transform_2, window_bounds = array<i64: 8, 128>}, {transform_indices = @transform_3, window_bounds = array<i64: 128, 128>}, {transform_indices = @transform_4, window_bounds = array<i64: 8, 128>}, {transform_indices = @transform_5, window_bounds = array<i64: 8, 128>}, {transform_indices = @transform_6, window_bounds = array<i64: 1, 2, 8, 128>}, {transform_indices = @transform_7, window_bounds = array<i64: 1, 2, 8, 128>}]} {
    %c0 = arith.constant 0 : index
    %c0_0 = arith.constant 0 : index
    %0 = vector.load %arg1[%c0, %c0_0] : memref<8x128xbf16, #tpu.memory_space<vmem>>, vector<8x128xbf16>
    %c0_1 = arith.constant 0 : index
    %c0_2 = arith.constant 0 : index
    %1 = vector.load %arg2[%c0_1, %c0_2] : memref<128x128xbf16, #tpu.memory_space<vmem>>, vector<128x128xbf16>
    %cst = arith.constant dense<0.000000e+00> : vector<8x128xf32>
    %2 = tpu.matmul %0, %1, %cst {dimension_numbers = #tpu.dot_dimension_numbers<[1], [0], [0], [1], [0, 0, 1, 1], [], []>} : vector<8x128xbf16>, vector<128x128xbf16>, vector<8x128xf32> -> vector<8x128xf32>
    %c0_3 = arith.constant 0 : index
    %c0_4 = arith.constant 0 : index
    %3 = vector.load %arg3[%c0_3, %c0_4] : memref<8x128xbf16, #tpu.memory_space<vmem>>, vector<8x128xbf16>
    %c0_5 = arith.constant 0 : index
    %c0_6 = arith.constant 0 : index
    %4 = vector.load %arg4[%c0_5, %c0_6] : memref<128x128xbf16, #tpu.memory_space<vmem>>, vector<128x128xbf16>
    %cst_7 = arith.constant dense<0.000000e+00> : vector<8x128xf32>
    %5 = tpu.matmul %3, %4, %cst_7 {dimension_numbers = #tpu.dot_dimension_numbers<[1], [0], [0], [1], [0, 0, 1, 1], [], []>} : vector<8x128xbf16>, vector<128x128xbf16>, vector<8x128xf32> -> vector<8x128xf32>
    %6 = arith.truncf %2 : vector<8x128xf32> to vector<8x128xbf16>
    %c0_8 = arith.constant 0 : index
    %c0_9 = arith.constant 0 : index
    %7 = vector.load %arg5[%c0_8, %c0_9] : memref<8x128xbf16, #tpu.memory_space<vmem>>, vector<8x128xbf16>
    tpu.vector_store %arg5[%c0_8, %c0_9], %6 {strides = array<i32>} : memref<8x128xbf16, #tpu.memory_space<vmem>>, vector<8x128xbf16>,
    %8 = arith.truncf %5 : vector<8x128xf32> to vector<8x128xbf16>
    %c0_10 = arith.constant 0 : index
    %c0_11 = arith.constant 0 : index
    %9 = vector.load %arg6[%c0_10, %c0_11] : memref<8x128xbf16, #tpu.memory_space<vmem>>, vector<8x128xbf16>
    tpu.vector_store %arg6[%c0_10, %c0_11], %8 {strides = array<i32>} : memref<8x128xbf16, #tpu.memory_space<vmem>>, vector<8x128xbf16>,
    %cst_12 = arith.constant dense<0.000000e+00> : vector<8xf32>
    %10 = vector.multi_reduction <add>, %2, %cst_12 [1] : vector<8x128xf32> to vector<8xf32>
    %11 = vector.shape_cast %10 : vector<8xf32> to vector<8x1xf32>
    %12 = vector.shape_cast %11 : vector<8x1xf32> to vector<8x1xf32>
    %13 = vector.broadcast %12 : vector<8x1xf32> to vector<8x128xf32>
    %c0_13 = arith.constant 0 : index
    %c0_14 = arith.constant 0 : index
    %c0_15 = arith.constant 0 : index
    %c0_16 = arith.constant 0 : index
    %14 = vector.load %arg7[%c0_13, %c0_14, %c0_15, %c0_16] : memref<1x2x8x128xf32, #tpu.memory_space<vmem>>, vector<1x1x8x128xf32>
    %15 = vector.shape_cast %14 : vector<1x1x8x128xf32> to vector<8x128xf32>
    %16 = vector.shape_cast %13 : vector<8x128xf32> to vector<1x1x8x128xf32>
    tpu.vector_store %arg7[%c0_13, %c0_14, %c0_15, %c0_16], %16 {strides = array<i32>} : memref<1x2x8x128xf32, #tpu.memory_space<vmem>>, vector<1x1x8x128xf32>,
    %17 = arith.mulf %2, %2 : vector<8x128xf32>
    %cst_17 = arith.constant dense<0.000000e+00> : vector<8xf32>
    %18 = vector.multi_reduction <add>, %17, %cst_17 [1] : vector<8x128xf32> to vector<8xf32>
    %19 = vector.shape_cast %18 : vector<8xf32> to vector<8x1xf32>
    %20 = vector.shape_cast %19 : vector<8x1xf32> to vector<8x1xf32>
    %21 = vector.broadcast %20 : vector<8x1xf32> to vector<8x128xf32>
    %c0_18 = arith.constant 0 : index
    %c1 = arith.constant 1 : index
    %c0_19 = arith.constant 0 : index
    %c0_20 = arith.constant 0 : index
    %22 = vector.load %arg7[%c0_18, %c1, %c0_19, %c0_20] : memref<1x2x8x128xf32, #tpu.memory_space<vmem>>, vector<1x1x8x128xf32>
    %23 = vector.shape_cast %22 : vector<1x1x8x128xf32> to vector<8x128xf32>
    %24 = vector.shape_cast %21 : vector<8x128xf32> to vector<1x1x8x128xf32>
    tpu.vector_store %arg7[%c0_18, %c1, %c0_19, %c0_20], %24 {strides = array<i32>} : memref<1x2x8x128xf32, #tpu.memory_space<vmem>>, vector<1x1x8x128xf32>,
    %cst_21 = arith.constant dense<0.000000e+00> : vector<8xf32>
    %25 = vector.multi_reduction <add>, %5, %cst_21 [1] : vector<8x128xf32> to vector<8xf32>
    %26 = vector.shape_cast %25 : vector<8xf32> to vector<8x1xf32>
    %27 = vector.shape_cast %26 : vector<8x1xf32> to vector<8x1xf32>
    %28 = vector.broadcast %27 : vector<8x1xf32> to vector<8x128xf32>
    %c0_22 = arith.constant 0 : index
    %c0_23 = arith.constant 0 : index
    %c0_24 = arith.constant 0 : index
    %c0_25 = arith.constant 0 : index
    %29 = vector.load %arg8[%c0_22, %c0_23, %c0_24, %c0_25] : memref<1x2x8x128xf32, #tpu.memory_space<vmem>>, vector<1x1x8x128xf32>
    %30 = vector.shape_cast %29 : vector<1x1x8x128xf32> to vector<8x128xf32>
    %31 = vector.shape_cast %28 : vector<8x128xf32> to vector<1x1x8x128xf32>
    tpu.vector_store %arg8[%c0_22, %c0_23, %c0_24, %c0_25], %31 {strides = array<i32>} : memref<1x2x8x128xf32, #tpu.memory_space<vmem>>, vector<1x1x8x128xf32>,
    %32 = arith.mulf %5, %5 : vector<8x128xf32>
    %cst_26 = arith.constant dense<0.000000e+00> : vector<8xf32>
    %33 = vector.multi_reduction <add>, %32, %cst_26 [1] : vector<8x128xf32> to vector<8xf32>
    %34 = vector.shape_cast %33 : vector<8xf32> to vector<8x1xf32>
    %35 = vector.shape_cast %34 : vector<8x1xf32> to vector<8x1xf32>
    %36 = vector.broadcast %35 : vector<8x1xf32> to vector<8x128xf32>
    %c0_27 = arith.constant 0 : index
    %c1_28 = arith.constant 1 : index
    %c0_29 = arith.constant 0 : index
    %c0_30 = arith.constant 0 : index
    %37 = vector.load %arg8[%c0_27, %c1_28, %c0_29, %c0_30] : memref<1x2x8x128xf32, #tpu.memory_space<vmem>>, vector<1x1x8x128xf32>
    %38 = vector.shape_cast %37 : vector<1x1x8x128xf32> to vector<8x128xf32>
    %39 = vector.shape_cast %36 : vector<8x128xf32> to vector<1x1x8x128xf32>
    tpu.vector_store %arg8[%c0_27, %c1_28, %c0_29, %c0_30], %39 {strides = array<i32>} : memref<1x2x8x128xf32, #tpu.memory_space<vmem>>, vector<1x1x8x128xf32>,
    return
  }
  func.func @transform_0(%arg0: i32) -> (i32, i32) {
    %c0_i32 = arith.constant 0 : i32
    %c0_i32_0 = arith.constant 0 : i32
    %c0_i32_1 = arith.constant 0 : i32
    return %c0_i32, %c0_i32_0 : i32, i32
  }
  func.func @transform_1(%arg0: i32) -> (i32, i32) {
    %c0_i32 = arith.constant 0 : i32
    %c0_i32_0 = arith.constant 0 : i32
    return %c0_i32, %arg0 : i32, i32
  }
  func.func @transform_2(%arg0: i32) -> (i32, i32) {
    %c0_i32 = arith.constant 0 : i32
    %c0_i32_0 = arith.constant 0 : i32
    %c0_i32_1 = arith.constant 0 : i32
    return %c0_i32, %c0_i32_0 : i32, i32
  }
  func.func @transform_3(%arg0: i32) -> (i32, i32) {
    %c0_i32 = arith.constant 0 : i32
    %c0_i32_0 = arith.constant 0 : i32
    return %c0_i32, %arg0 : i32, i32
  }
  func.func @transform_4(%arg0: i32) -> (i32, i32) {
    %c0_i32 = arith.constant 0 : i32
    %c0_i32_0 = arith.constant 0 : i32
    return %c0_i32, %arg0 : i32, i32
  }
  func.func @transform_5(%arg0: i32) -> (i32, i32) {
    %c0_i32 = arith.constant 0 : i32
    %c0_i32_0 = arith.constant 0 : i32
    return %c0_i32, %arg0 : i32, i32
  }
  func.func @transform_6(%arg0: i32) -> (i32, i32, i32, i32) {
    %c0_i32 = arith.constant 0 : i32
    %c0_i32_0 = arith.constant 0 : i32
    %c0_i32_1 = arith.constant 0 : i32
    %c0_i32_2 = arith.constant 0 : i32
    return %arg0, %c0_i32, %c0_i32_0, %c0_i32_1 : i32, i32, i32, i32
  }
  func.func @transform_7(%arg0: i32) -> (i32, i32, i32, i32) {
    %c0_i32 = arith.constant 0 : i32
    %c0_i32_0 = arith.constant 0 : i32
    %c0_i32_1 = arith.constant 0 : i32
    %c0_i32_2 = arith.constant 0 : i32
    return %arg0, %c0_i32, %c0_i32_0, %c0_i32_1 : i32, i32, i32, i32
  }
}

module attributes {stable_mosaic.version = 11 : i64} {
  func.func @_tail_kernel(%arg0: i32, %arg1: memref<8x128xbf16, #tpu.memory_space<vmem>>, %arg2: memref<8x128xbf16, #tpu.memory_space<vmem>>, %arg3: memref<8x1xf32, #tpu.memory_space<vmem>>, %arg4: memref<8x1xf32, #tpu.memory_space<vmem>>, %arg5: memref<8x1xf32, #tpu.memory_space<vmem>>, %arg6: memref<8x128xf32, #tpu.memory_space<vmem>>) attributes {dimension_semantics = [#tpu.dimension_semantics<parallel>], iteration_bounds = array<i64: 1>, scalar_prefetch = 0 : i64, scratch_operands = 0 : i64, tpu.core_type = #tpu.core_type<tc>, window_params = [{transform_indices = @transform_0, window_bounds = array<i64: 8, 128>}, {transform_indices = @transform_1, window_bounds = array<i64: 8, 128>}, {pipeline_mode = #tpu.pipeline_mode<synchronous>, transform_indices = @transform_2, window_bounds = array<i64: 8, 1>}, {pipeline_mode = #tpu.pipeline_mode<synchronous>, transform_indices = @transform_3, window_bounds = array<i64: 8, 1>}, {pipeline_mode = #tpu.pipeline_mode<synchronous>, transform_indices = @transform_4, window_bounds = array<i64: 8, 1>}, {transform_indices = @transform_5, window_bounds = array<i64: 8, 128>}]} {
    %c0 = arith.constant 0 : index
    %c0_0 = arith.constant 0 : index
    %0 = vector.load %arg1[%c0, %c0_0] : memref<8x128xbf16, #tpu.memory_space<vmem>>, vector<8x128xbf16>
    %1 = arith.extf %0 : vector<8x128xbf16> to vector<8x128xf32>
    %c0_1 = arith.constant 0 : index
    %c0_2 = arith.constant 0 : index
    %2 = vector.load %arg3[%c0_1, %c0_2] : memref<8x1xf32, #tpu.memory_space<vmem>>, vector<8x1xf32>
    %3 = vector.broadcast %2 : vector<8x1xf32> to vector<8x128xf32>
    %4 = arith.mulf %1, %3 : vector<8x128xf32>
    %c0_3 = arith.constant 0 : index
    %c0_4 = arith.constant 0 : index
    %5 = vector.load %arg2[%c0_3, %c0_4] : memref<8x128xbf16, #tpu.memory_space<vmem>>, vector<8x128xbf16>
    %6 = arith.extf %5 : vector<8x128xbf16> to vector<8x128xf32>
    %c0_5 = arith.constant 0 : index
    %c0_6 = arith.constant 0 : index
    %7 = vector.load %arg4[%c0_5, %c0_6] : memref<8x1xf32, #tpu.memory_space<vmem>>, vector<8x1xf32>
    %8 = vector.broadcast %7 : vector<8x1xf32> to vector<8x128xf32>
    %9 = arith.mulf %6, %8 : vector<8x128xf32>
    %10 = arith.addf %4, %9 : vector<8x128xf32>
    %c0_7 = arith.constant 0 : index
    %c0_8 = arith.constant 0 : index
    %11 = vector.load %arg5[%c0_7, %c0_8] : memref<8x1xf32, #tpu.memory_space<vmem>>, vector<8x1xf32>
    %12 = vector.broadcast %11 : vector<8x1xf32> to vector<8x128xf32>
    %13 = arith.addf %10, %12 : vector<8x128xf32>
    %cst = arith.constant 3.000000e-01 : f32
    %14 = vector.broadcast %cst : f32 to vector<8x128xf32>
    %15 = arith.mulf %14, %13 : vector<8x128xf32>
    %16 = arith.maximumf %13, %15 : vector<8x128xf32>
    %c0_9 = arith.constant 0 : index
    %c0_10 = arith.constant 0 : index
    %17 = vector.load %arg6[%c0_9, %c0_10] : memref<8x128xf32, #tpu.memory_space<vmem>>, vector<8x128xf32>
    tpu.vector_store %arg6[%c0_9, %c0_10], %16 {strides = array<i32>} : memref<8x128xf32, #tpu.memory_space<vmem>>, vector<8x128xf32>,
    return
  }
  func.func @transform_0(%arg0: i32) -> (i32, i32) {
    %c0_i32 = arith.constant 0 : i32
    %c0_i32_0 = arith.constant 0 : i32
    return %c0_i32, %arg0 : i32, i32
  }
  func.func @transform_1(%arg0: i32) -> (i32, i32) {
    %c0_i32 = arith.constant 0 : i32
    %c0_i32_0 = arith.constant 0 : i32
    return %c0_i32, %arg0 : i32, i32
  }
  func.func @transform_2(%arg0: i32) -> (i32, i32) {
    %c0_i32 = arith.constant 0 : i32
    %c0_i32_0 = arith.constant 0 : i32
    %c0_i32_1 = arith.constant 0 : i32
    return %c0_i32, %c0_i32_0 : i32, i32
  }
  func.func @transform_3(%arg0: i32) -> (i32, i32) {
    %c0_i32 = arith.constant 0 : i32
    %c0_i32_0 = arith.constant 0 : i32
    %c0_i32_1 = arith.constant 0 : i32
    return %c0_i32, %c0_i32_0 : i32, i32
  }
  func.func @transform_4(%arg0: i32) -> (i32, i32) {
    %c0_i32 = arith.constant 0 : i32
    %c0_i32_0 = arith.constant 0 : i32
    %c0_i32_1 = arith.constant 0 : i32
    return %c0_i32, %c0_i32_0 : i32, i32
  }
  func.func @transform_5(%arg0: i32) -> (i32, i32) {
    %c0_i32 = arith.constant 0 : i32
    %c0_i32_0 = arith.constant 0 : i32
    return %c0_i32, %arg0 : i32, i32
  }
}

</mosaic_0001>

<llo_original>
// kernel: resnet2d_forward.5
$region0: #{resnet2d_forward.5}
  #allocation0 [shape = 'u32[]', space=smem, size = 0x4, offset = 0x4, fixed_abs, tag = 'smem constant byte address 0x4 - core index']
  #allocation1 [shape = 'u32[72,128]{1,0:T(1,128)}', space=vmem, size = 0x9000, scoped, tag = 'internal scratch']
  %s0 = inlined_call_operand.vmem [shape: bf16[8,256], index: 0, kind: input, shape index: {}]
  %s1 = inlined_call_operand.vmem [shape: f32[8,1], index: 1, kind: input, shape index: {}]
  %s2 = inlined_call_operand.vmem [shape: f32[8,1], index: 2, kind: input, shape index: {}]
  %s3 = inlined_call_operand.vmem [shape: bf16[8,256], index: 3, kind: output, shape index: {}]
  %s4 = sld [smem:[#allocation0]]
  $region45: #{resnet2d_forward.5} parent=0
    _
  %s6 = ssub.s32 1, %s4
  %s7 = scalar_select 0, %s6, %s4
  loop: start=0, step=1, limit=4
  $region2: #{resnet2d_forward.5} parent=0 // loop_pre_header
    _
  $region3: #{resnet2d_forward.5} parent=0 // loop_header
    %s9 = sphi 0, %s13
    %p10 = scmp.ge.s32.totalorder %s9, 4
    %s19 = sphi 0, %s21
    %s22 = sphi 0, %s19
    %s23 = sphi 0, %s22
    %s39 = sphi 0, %s23
    %s43 = sphi 0, %s43
    %s45 = sphi 0, %s43
    %s46 = sphi 0, %s45
    %s60 = sphi 0, %s46
    %s64 = sphi 0, %s64
    %s66 = sphi 0, %s64
    %s67 = sphi 0, %s66
    %s81 = sphi 0, %s67
    %s87 = sphi 0, %s89
    %s90 = sphi 0, %s87
    %s91 = sphi 0, %s90
    %s107 = sphi 0, %s91
  $region4: #{resnet2d_forward.5} parent=0 // loop_header_branch
    %12 = sbr.rel (%p10) target = $region8
  $region5: #{resnet2d_forward.5} parent=0 // loop_body
    %s14 = ssub.s32 %s9, 1
    %s15 = ssub.s32 %s9, 2
    %s16 = sadd.s32 %s9, 1
    %s17 = ssub.s32 %s9, %s16
    %p18 = scmp.eq.s32.totalorder %s17, 0
    %s20 = sadd.s32 %s19, 1
    %s21 = scalar_select %p18, %s19, %s20
    %p24 = pneg %p18
    %p25 = scmp.eq.s32.totalorder %s9, 1
    %p26 = por %p24, %p25
    %p27 = scmp.ne.s32.totalorder %s19, %s22
    %p28 = scmp.eq.s32.totalorder %s9, 0
    %p29 = por %p27, %p28
    %p30 = scmp.ne.s32.totalorder %s19, %s22
    %p31 = scmp.eq.s32.totalorder %s14, 1
    %p32 = por %p30, %p31
    %p33 = scmp.ne.s32.totalorder %s22, %s23
    %p34 = scmp.eq.s32.totalorder %s14, 0
    %p35 = por %p33, %p34
    %p36 = scmp.ne.s32.totalorder %s22, %s23
    %p37 = scmp.eq.s32.totalorder %s15, 1
    %p38 = por %p36, %p37
    %p40 = scmp.ne.s32.totalorder %s23, %s39
    %p41 = scmp.eq.s32.totalorder %s15, 0
    %p42 = por %p40, %p41
    %s44 = sadd.s32 %s43, 1
    %p47 = scmp.eq.s32.totalorder %s9, 1
    %p48 = scmp.ne.s32.totalorder %s43, %s45
    %p49 = scmp.eq.s32.totalorder %s9, 0
    %p50 = por %p48, %p49
    %p51 = scmp.ne.s32.totalorder %s43, %s45
    %p52 = scmp.eq.s32.totalorder %s14, 1
    %p53 = por %p51, %p52
    %p54 = scmp.ne.s32.totalorder %s45, %s46
    %p55 = scmp.eq.s32.totalorder %s14, 0
    %p56 = por %p54, %p55
    %p57 = scmp.ne.s32.totalorder %s45, %s46
    %p58 = scmp.eq.s32.totalorder %s15, 1
    %p59 = por %p57, %p58
    %p61 = scmp.ne.s32.totalorder %s46, %s60
    %p62 = scmp.eq.s32.totalorder %s15, 0
    %p63 = por %p61, %p62
    %s65 = sadd.s32 %s64, 1
    %p68 = scmp.eq.s32.totalorder %s9, 1
    %p69 = scmp.ne.s32.totalorder %s64, %s66
    %p70 = scmp.eq.s32.totalorder %s9, 0
    %p71 = por %p69, %p70
    %p72 = scmp.ne.s32.totalorder %s64, %s66
    %p73 = scmp.eq.s32.totalorder %s14, 1
    %p74 = por %p72, %p73
    %p75 = scmp.ne.s32.totalorder %s66, %s67
    %p76 = scmp.eq.s32.totalorder %s14, 0
    %p77 = por %p75, %p76
    %p78 = scmp.ne.s32.totalorder %s66, %s67
    %p79 = scmp.eq.s32.totalorder %s15, 1
    %p80 = por %p78, %p79
    %p82 = scmp.ne.s32.totalorder %s67, %s81
    %p83 = scmp.eq.s32.totalorder %s15, 0
    %p84 = por %p82, %p83
    %s85 = ssub.s32 %s9, %s16
    %p86 = scmp.eq.s32.totalorder %s85, 0
    %s88 = sadd.s32 %s87, 1
    %s89 = scalar_select %p86, %s87, %s88
    %p92 = pneg %p86
    %p93 = scmp.eq.s32.totalorder %s9, 1
    %p94 = por %p92, %p93
    %p95 = scmp.ne.s32.totalorder %s87, %s90
    %p96 = scmp.eq.s32.totalorder %s9, 0
    %p97 = por %p95, %p96
    %p98 = scmp.ne.s32.totalorder %s87, %s90
    %p99 = scmp.eq.s32.totalorder %s14, 1
    %p100 = por %p98, %p99
    %p101 = scmp.ne.s32.totalorder %s90, %s91
    %p102 = scmp.eq.s32.totalorder %s14, 0
    %p103 = por %p101, %p102
    %p104 = scmp.ne.s32.totalorder %s90, %s91
    %p105 = scmp.eq.s32.totalorder %s15, 1
    %p106 = por %p104, %p105
    %p108 = scmp.ne.s32.totalorder %s91, %s107
    %p109 = scmp.eq.s32.totalorder %s15, 0
    %p110 = por %p108, %p109
    %p111 = scmp.le.s32.totalorder 1, %s9
    %p112 = scmp.lt.s32.totalorder %s9, 3
    %p113 = pnand %p111, %p112
    %p114 = pneg %p113
    // Predicated region
    $region9: #{resnet2d_forward.5} parent=5 // pred_check
      _
    $region10: #{resnet2d_forward.5} parent=5 // pred_check_branch
      %116 = sbr.rel (%p113) target = $region12
    $region11: #{resnet2d_forward.5} parent=5 // pred_region
      %s117 = ssub.s32 %s9, 1
      // Predicated region
      $region13: #{resnet2d_forward.5} parent=11 // pred_check
        %p118 = pneg %p56
      $region14: #{resnet2d_forward.5} parent=11 // pred_check_branch
        %120 = sbr.rel (%p118) target = $region16
      $region15: #{resnet2d_forward.5} parent=11 // pred_region
        _
      $region16: #{resnet2d_forward.5} parent=11 // pred_fallthru
        _
      // Predicated region
      $region17: #{resnet2d_forward.5} parent=11 // pred_check
        %p121 = pneg %p77
      $region18: #{resnet2d_forward.5} parent=11 // pred_check_branch
        %123 = sbr.rel (%p121) target = $region20
      $region19: #{resnet2d_forward.5} parent=11 // pred_region
        _
      $region20: #{resnet2d_forward.5} parent=11 // pred_fallthru
        _
    $region12: #{resnet2d_forward.5} parent=5 // pred_fallthru
      _
    %p124 = scmp.lt.s32.totalorder %s9, 2
    // Predicated region
    $region21: #{resnet2d_forward.5} parent=5 // pred_check
      %p125 = pneg %p124
    $region22: #{resnet2d_forward.5} parent=5 // pred_check_branch
      %127 = sbr.rel (%p125) target = $region24
    $region23: #{resnet2d_forward.5} parent=5 // pred_region
      // Predicated region
      $region25: #{resnet2d_forward.5} parent=23 // pred_check
        %p128 = pneg %p29
      $region26: #{resnet2d_forward.5} parent=23 // pred_check_branch
        %130 = sbr.rel (%p128) target = $region28
      $region27: #{resnet2d_forward.5} parent=23 // pred_region
        %p131 = scmp.lt.s32.totalorder %s9, 1
        %s132 = scalar_select %p131, %s9, 1
        %s133 = smul.addr %s132, 4
        %s134 = scalar_lea.vmem %s0, %s133
      $region28: #{resnet2d_forward.5} parent=23 // pred_fallthru
        _
    $region24: #{resnet2d_forward.5} parent=5 // pred_fallthru
      _
    %p135 = scmp.le.s32.totalorder 1, %s9
    %p136 = scmp.lt.s32.totalorder %s9, 3
    %p137 = pnand %p135, %p136
    %p138 = pneg %p137
    // Predicated region
    $region29: #{resnet2d_forward.5} parent=5 // pred_check
      _
    $region30: #{resnet2d_forward.5} parent=5 // pred_check_branch
      %140 = sbr.rel (%p137) target = $region32
    $region31: #{resnet2d_forward.5} parent=5 // pred_region
      %s141 = ssub.s32 %s9, 1
      %p142 = scmp.lt.s32.totalorder %s14, 1
      %s143 = scalar_select %p142, %s14, 1
      %s144 = smul.addr %s143, 4
      %s145 = scalar_lea.vmem %s0, %s144
      %p146 = pneg %p35
      %p147 = pneg %p32
      %p148 = pneg %p56
      %p149 = pneg %p53
      %p150 = pneg %p77
      %p151 = pneg %p74
      %p152 = pneg %p103
      %p153 = pneg %p100
      %p154 = scmp.lt.s32.totalorder %s14, 1
      %s155 = scalar_select %p154, %s14, 1
      %s156 = smul.addr %s155, 4
      %s157 = scalar_lea.vmem %s3, %s156
      %p158 = scmp.lt.s32.totalorder %s14, 1
      %s159 = scalar_select %p158, %s14, 1
      %s160 = smul.addr %s159, 4
      %s161 = scalar_lea.vmem %s0, %s160
      %p162 = scmp.lt.s32.totalorder %s14, 1
      %s163 = scalar_select %p162, %s14, 1
      %s164 = smul.addr %s163, 4
      %s165 = scalar_lea.vmem %s3, %s164
      %v166 = vld [vmem:[%s161] sm:$0xf]
      %v167 = vunpack.c.l.bf16 %v166
      %v168 = vld [vmem:[%s1] sm:$0xff]
      %170 = vset.pattern.permute.xlu0 0
      %171 = vperm.xlu0 %170, %v168
      %v172 = vpop.permute.xlu0 %171
      %v174 = vmul.f32 %v167, %v172
      %v175 = vld [vmem:[%s2] sm:$0xff]
      %177 = vset.pattern.permute.xlu0 0
      %178 = vperm.xlu0 %177, %v175
      %v179 = vpop.permute.xlu0 %178
      %v181 = vadd.f32 %v174, %v179
      %v182 = vmul.f32 %v181, 0.3
      %v183 = vmax.f32 %v181, %v182
      %v184 = vpack.c.bf16 %v183, %v183
      %185 = vst [vmem:[%s165] sm:$0xf] %v184
      %p186 = scmp.lt.s32.totalorder %s14, 1
      %s187 = scalar_select %p186, %s14, 1
      %s188 = smul.addr %s187, 4
      %s189 = scalar_lea.vmem %s3, %s188
      // Predicated region
      $region33: #{resnet2d_forward.5} parent=31 // pred_check
        %p190 = pneg %p100
      $region34: #{resnet2d_forward.5} parent=31 // pred_check_branch
        %192 = sbr.rel (%p190) target = $region36
      $region35: #{resnet2d_forward.5} parent=31 // pred_region
        _
      $region36: #{resnet2d_forward.5} parent=31 // pred_fallthru
        _
    $region32: #{resnet2d_forward.5} parent=5 // pred_fallthru
      _
    %p193 = scmp.le.s32.totalorder 2, %s9
    // Predicated region
    $region37: #{resnet2d_forward.5} parent=5 // pred_check
      %p194 = pneg %p193
    $region38: #{resnet2d_forward.5} parent=5 // pred_check_branch
      %196 = sbr.rel (%p194) target = $region40
    $region39: #{resnet2d_forward.5} parent=5 // pred_region
      %s197 = ssub.s32 %s9, 2
      // Predicated region
      $region41: #{resnet2d_forward.5} parent=39 // pred_check
        %p198 = pneg %p106
      $region42: #{resnet2d_forward.5} parent=39 // pred_check_branch
        %200 = sbr.rel (%p198) target = $region44
      $region43: #{resnet2d_forward.5} parent=39 // pred_region
        %p201 = scmp.lt.s32.totalorder %s15, 1
        %s202 = scalar_select %p201, %s15, 1
        %s203 = smul.addr %s202, 4
        %s204 = scalar_lea.vmem %s3, %s203
      $region44: #{resnet2d_forward.5} parent=39 // pred_fallthru
        _
    $region40: #{resnet2d_forward.5} parent=5 // pred_fallthru
      _
  $region6: #{resnet2d_forward.5} parent=0 // loop_footer
    %s13 = sadd.s32 1, %s9
  $region7: #{resnet2d_forward.5} parent=0 // loop_footer_branch
    %8 = sbr.rel target = $region3
  $region8: #{resnet2d_forward.5} parent=0 // loop_exit
    _

// kernel: resnet2d_forward.4
$region0: #{resnet2d_forward.4}
  #allocation0 [shape = 'u32[]', space=smem, size = 0x4, offset = 0x4, fixed_abs, tag = 'smem constant byte address 0x4 - core index']
  #allocation1 [shape = 'u32[72,128]{1,0:T(1,128)}', space=vmem, size = 0x9000, scoped, tag = 'internal scratch']
  %s0 = inlined_call_operand.vmem [shape: bf16[4,128], index: 0, kind: input, shape index: {}]
  %s1 = inlined_call_operand.vmem [shape: bf16[128,512], index: 1, kind: input, shape index: {}]
  %s2 = inlined_call_operand.vmem [shape: bf16[4,512], index: 2, kind: output, shape index: {0}]
  %s3 = inlined_call_operand.vmem [shape: f32[4,2,4,128], index: 3, kind: output, shape index: {1}]
  %4 = xla_tuple %s2, %s3
  %s5 = sld [smem:[#allocation0]]
  $region90: #{resnet2d_forward.4} parent=0
    _
  %s7 = ssub.s32 1, %s5
  %s8 = scalar_select 0, %s7, %s5
  $region1: #{resnet2d_forward.4} parent=0
    #allocation2 [shape = 'u8[65536]{0}', space=vmem, size = 0x10000, scoped, tag = 'input window, operand 1']
    loop: start=0, step=1, limit=6
    $region2: #{resnet2d_forward.4} parent=1 // loop_pre_header
      _
    $region3: #{resnet2d_forward.4} parent=1 // loop_header
      %s10 = sphi 0, %s14
      %p11 = scmp.ge.s32.totalorder %s10, 6
      %s18 = sphi 0, %s18
      %s20 = sphi 0, %s18
      %s21 = sphi 0, %s20
      %s35 = sphi 0, %s21
      %s41 = sphi 0, %s43
      %s44 = sphi 0, %s41
      %s45 = sphi 0, %s44
      %s61 = sphi 0, %s45
      %s67 = sphi 0, %s69
      %s70 = sphi 0, %s67
      %s71 = sphi 0, %s70
      %s87 = sphi 0, %s71
      %s93 = sphi 0, %s95
      %s96 = sphi 0, %s93
      %s97 = sphi 0, %s96
      %s113 = sphi 0, %s97
    $region4: #{resnet2d_forward.4} parent=1 // loop_header_branch
      %13 = sbr.rel (%p11) target = $region8
    $region5: #{resnet2d_forward.4} parent=1 // loop_body
      %s15 = ssub.s32 %s10, 1
      %s16 = ssub.s32 %s10, 2
      %s17 = sadd.s32 %s10, 1
      %s19 = sadd.s32 %s18, 1
      %p22 = scmp.eq.s32.totalorder %s10, 3
      %p23 = scmp.ne.s32.totalorder %s18, %s20
      %p24 = scmp.eq.s32.totalorder %s10, 0
      %p25 = por %p23, %p24
      %p26 = scmp.ne.s32.totalorder %s18, %s20
      %p27 = scmp.eq.s32.totalorder %s15, 3
      %p28 = por %p26, %p27
      %p29 = scmp.ne.s32.totalorder %s20, %s21
      %p30 = scmp.eq.s32.totalorder %s15, 0
      %p31 = por %p29, %p30
      %p32 = scmp.ne.s32.totalorder %s20, %s21
      %p33 = scmp.eq.s32.totalorder %s16, 3
      %p34 = por %p32, %p33
      %p36 = scmp.ne.s32.totalorder %s21, %s35
      %p37 = scmp.eq.s32.totalorder %s16, 0
      %p38 = por %p36, %p37
      %s39 = ssub.s32 %s10, %s17
      %p40 = scmp.eq.s32.totalorder %s39, 0
      %s42 = sadd.s32 %s41, 1
      %s43 = scalar_select %p40, %s41, %s42
      %p46 = pneg %p40
      %p47 = scmp.eq.s32.totalorder %s10, 3
      %p48 = por %p46, %p47
      %p49 = scmp.ne.s32.totalorder %s41, %s44
      %p50 = scmp.eq.s32.totalorder %s10, 0
      %p51 = por %p49, %p50
      %p52 = scmp.ne.s32.totalorder %s41, %s44
      %p53 = scmp.eq.s32.totalorder %s15, 3
      %p54 = por %p52, %p53
      %p55 = scmp.ne.s32.totalorder %s44, %s45
      %p56 = scmp.eq.s32.totalorder %s15, 0
      %p57 = por %p55, %p56
      %p58 = scmp.ne.s32.totalorder %s44, %s45
      %p59 = scmp.eq.s32.totalorder %s16, 3
      %p60 = por %p58, %p59
      %p62 = scmp.ne.s32.totalorder %s45, %s61
      %p63 = scmp.eq.s32.totalorder %s16, 0
      %p64 = por %p62, %p63
      %s65 = ssub.s32 %s10, %s17
      %p66 = scmp.eq.s32.totalorder %s65, 0
      %s68 = sadd.s32 %s67, 1
      %s69 = scalar_select %p66, %s67, %s68
      %p72 = pneg %p66
      %p73 = scmp.eq.s32.totalorder %s10, 3
      %p74 = por %p72, %p73
      %p75 = scmp.ne.s32.totalorder %s67, %s70
      %p76 = scmp.eq.s32.totalorder %s10, 0
      %p77 = por %p75, %p76
      %p78 = scmp.ne.s32.totalorder %s67, %s70
      %p79 = scmp.eq.s32.totalorder %s15, 3
      %p80 = por %p78, %p79
      %p81 = scmp.ne.s32.totalorder %s70, %s71
      %p82 = scmp.eq.s32.totalorder %s15, 0
      %p83 = por %p81, %p82
      %p84 = scmp.ne.s32.totalorder %s70, %s71
      %p85 = scmp.eq.s32.totalorder %s16, 3
      %p86 = por %p84, %p85
      %p88 = scmp.ne.s32.totalorder %s71, %s87
      %p89 = scmp.eq.s32.totalorder %s16, 0
      %p90 = por %p88, %p89
      %s91 = ssub.s32 %s10, %s17
      %p92 = scmp.eq.s32.totalorder %s91, 0
      %s94 = sadd.s32 %s93, 1
      %s95 = scalar_select %p92, %s93, %s94
      %p98 = pneg %p92
      %p99 = scmp.eq.s32.totalorder %s10, 3
      %p100 = por %p98, %p99
      %p101 = scmp.ne.s32.totalorder %s93, %s96
      %p102 = scmp.eq.s32.totalorder %s10, 0
      %p103 = por %p101, %p102
      %p104 = scmp.ne.s32.totalorder %s93, %s96
      %p105 = scmp.eq.s32.totalorder %s15, 3
      %p106 = por %p104, %p105
      %p107 = scmp.ne.s32.totalorder %s96, %s97
      %p108 = scmp.eq.s32.totalorder %s15, 0
      %p109 = por %p107, %p108
      %p110 = scmp.ne.s32.totalorder %s96, %s97
      %p111 = scmp.eq.s32.totalorder %s16, 3
      %p112 = por %p110, %p111
      %p114 = scmp.ne.s32.totalorder %s97, %s113
      %p115 = scmp.eq.s32.totalorder %s16, 0
      %p116 = por %p114, %p115
      %p117 = scmp.le.s32.totalorder 1, %s10
      %p118 = scmp.lt.s32.totalorder %s10, 5
      %p119 = pnand %p117, %p118
      %p120 = pneg %p119
      // Predicated region
      $region9: #{resnet2d_forward.4} parent=5 // pred_check
        _
      $region10: #{resnet2d_forward.4} parent=5 // pred_check_branch
        %122 = sbr.rel (%p119) target = $region12
      $region11: #{resnet2d_forward.4} parent=5 // pred_region
        %s123 = ssub.s32 %s10, 1
        // Predicated region
        $region13: #{resnet2d_forward.4} parent=11 // pred_check
          %p124 = pneg %p31
        $region14: #{resnet2d_forward.4} parent=11 // pred_check_branch
          %126 = sbr.rel (%p124) target = $region16
        $region15: #{resnet2d_forward.4} parent=11 // pred_region
          _
        $region16: #{resnet2d_forward.4} parent=11 // pred_fallthru
          _
      $region12: #{resnet2d_forward.4} parent=5 // pred_fallthru
        _
      %p127 = scmp.lt.s32.totalorder %s10, 4
      // Predicated region
      $region17: #{resnet2d_forward.4} parent=5 // pred_check
        %p128 = pneg %p127
      $region18: #{resnet2d_forward.4} parent=5 // pred_check_branch
        %130 = sbr.rel (%p128) target = $region20
      $region19: #{resnet2d_forward.4} parent=5 // pred_region
        // Predicated region
        $region21: #{resnet2d_forward.4} parent=19 // pred_check
          %p131 = pneg %p51
        $region22: #{resnet2d_forward.4} parent=19 // pred_check_branch
          %133 = sbr.rel (%p131) target = $region24
        $region23: #{resnet2d_forward.4} parent=19 // pred_region
          %s134 = sand.u32 %s41, 1
          %s135 = sand.u32 %s41, 1
          %s136 = smul.addr %s135, 64
          %s137 = scalar_lea.vmem [#allocation2], %s136
          %s138 = smul.addr %s10, 4
          %s139 = scalar_lea.vmem %s1, %s138
          // Predicated region
          $region25: #{resnet2d_forward.4} parent=23 // pred_check
            _
          $region26: #{resnet2d_forward.4} parent=23 // pred_check_branch
            %141 = sbr.rel (0) target = $region28
          $region27: #{resnet2d_forward.4} parent=23 // pred_region
            // Predicated region
            $region29: #{resnet2d_forward.4} parent=27 // pred_check
              _
            $region30: #{resnet2d_forward.4} parent=27 // pred_check_branch
              %143 = sbr.rel target = $region32
            $region31: #{resnet2d_forward.4} parent=27 // pred_region
              // Predicated region
              $region44: #{resnet2d_forward.4} parent=31 // pred_check
                _
              $region45: #{resnet2d_forward.4} parent=31 // pred_check_branch
                %189 = sbr.rel (0) target = $region47
              $region46: #{resnet2d_forward.4} parent=31 // pred_region
                loop: start=0, step=1, limit=1
                $region48: #{resnet2d_forward.4} parent=46 // loop_pre_header
                  _
                $region49: #{resnet2d_forward.4} parent=46 // loop_header
                  %s191 = sphi 0, %s195
                  %p192 = scmp.ge.s32.totalorder %s191, 1
                  %s196 = sphi %s139, %s139
                  %s197 = sphi %s137, %s137
                $region50: #{resnet2d_forward.4} parent=46 // loop_header_branch
                  %194 = sbr.rel (%p192) target = $region54
                $region51: #{resnet2d_forward.4} parent=46 // loop_body
                  _
                $region52: #{resnet2d_forward.4} parent=46 // loop_footer
                  %s195 = sadd.s32 1, %s191
                $region53: #{resnet2d_forward.4} parent=46 // loop_footer_branch
                  %190 = sbr.rel target = $region49
                $region54: #{resnet2d_forward.4} parent=46 // loop_exit
                  _
                %s199 = ssub.s32 16, 1
                loop: start=0, step=1, limit=1
                $region55: #{resnet2d_forward.4} parent=46 // loop_pre_header
                  _
                $region56: #{resnet2d_forward.4} parent=46 // loop_header
                  %s201 = sphi 0, %s205
                  %p202 = scmp.ge.s32.totalorder %s201, 1
                  %s206 = sphi %s139, %s139
                  %s207 = sphi %s137, %s137
                $region57: #{resnet2d_forward.4} parent=46 // loop_header_branch
                  %204 = sbr.rel (%p202) target = $region61
                $region58: #{resnet2d_forward.4} parent=46 // loop_body
                  %v208 = vld [vmem:[%s206] sm:%s199]
                  %209 = vst [vmem:[%s207] sm:%s199] %v208
                  %v210 = vld [vmem:[%s206 + $0x10] sm:%s199]
                  %211 = vst [vmem:[%s207 + $0x4] sm:%s199] %v210
                  %v212 = vld [vmem:[%s206 + $0x20] sm:%s199]
                  %213 = vst [vmem:[%s207 + $0x8] sm:%s199] %v212
                  %v214 = vld [vmem:[%s206 + $0x30] sm:%s199]
                  %215 = vst [vmem:[%s207 + $0xc] sm:%s199] %v214
                  %v216 = vld [vmem:[%s206 + $0x40] sm:%s199]
                  %217 = vst [vmem:[%s207 + $0x10] sm:%s199] %v216
                  %v218 = vld [vmem:[%s206 + $0x50] sm:%s199]
                  %219 = vst [vmem:[%s207 + $0x14] sm:%s199] %v218
                  %v220 = vld [vmem:[%s206 + $0x60] sm:%s199]
                  %221 = vst [vmem:[%s207 + $0x18] sm:%s199] %v220
                  %v222 = vld [vmem:[%s206 + $0x70] sm:%s199]
                  %223 = vst [vmem:[%s207 + $0x1c] sm:%s199] %v222
                  %v224 = vld [vmem:[%s206 + $0x80] sm:%s199]
                  %225 = vst [vmem:[%s207 + $0x20] sm:%s199] %v224
                  %v226 = vld [vmem:[%s206 + $0x90] sm:%s199]
                  %227 = vst [vmem:[%s207 + $0x24] sm:%s199] %v226
                  %v228 = vld [vmem:[%s206 + $0xa0] sm:%s199]
                  %229 = vst [vmem:[%s207 + $0x28] sm:%s199] %v228
                  %v230 = vld [vmem:[%s206 + $0xb0] sm:%s199]
                  %231 = vst [vmem:[%s207 + $0x2c] sm:%s199] %v230
                  %v232 = vld [vmem:[%s206 + $0xc0] sm:%s199]
                  %233 = vst [vmem:[%s207 + $0x30] sm:%s199] %v232
                  %v234 = vld [vmem:[%s206 + $0xd0] sm:%s199]
                  %235 = vst [vmem:[%s207 + $0x34] sm:%s199] %v234
                  %v236 = vld [vmem:[%s206 + $0xe0] sm:%s199]
                  %237 = vst [vmem:[%s207 + $0x38] sm:%s199] %v236
                  %v238 = vld [vmem:[%s206 + $0xf0] sm:%s199]
                  %239 = vst [vmem:[%s207 + $0x3c] sm:%s199] %v238
                $region59: #{resnet2d_forward.4} parent=46 // loop_footer
                  %s205 = sadd.s32 1, %s201
                $region60: #{resnet2d_forward.4} parent=46 // loop_footer_branch
                  %200 = sbr.rel target = $region56
                $region61: #{resnet2d_forward.4} parent=46 // loop_exit
                  _
              $region47: #{resnet2d_forward.4} parent=31 // pred_fallthru
                _
            $region32: #{resnet2d_forward.4} parent=27 // pred_fallthru
              _
            // Predicated region
            $region33: #{resnet2d_forward.4} parent=27 // pred_check
              _
            $region34: #{resnet2d_forward.4} parent=27 // pred_check_branch
              %145 = sbr.rel (0) target = $region36
            $region35: #{resnet2d_forward.4} parent=27 // pred_region
              %s147 = ssub.s32 16, 1
              loop: start=0, step=1, limit=1
              $region37: #{resnet2d_forward.4} parent=35 // loop_pre_header
                _
              $region38: #{resnet2d_forward.4} parent=35 // loop_header
                %s149 = sphi 0, %s153
                %p150 = scmp.ge.s32.totalorder %s149, 1
                %s154 = sphi %s139, %s139
                %s155 = sphi %s137, %s137
              $region39: #{resnet2d_forward.4} parent=35 // loop_header_branch
                %152 = sbr.rel (%p150) target = $region43
              $region40: #{resnet2d_forward.4} parent=35 // loop_body
                %v156 = vld [vmem:[%s154] sm:%s147]
                %157 = vst [vmem:[%s155] sm:%s147] %v156
                %v158 = vld [vmem:[%s154 + $0x10] sm:%s147]
                %159 = vst [vmem:[%s155 + $0x4] sm:%s147] %v158
                %v160 = vld [vmem:[%s154 + $0x20] sm:%s147]
                %161 = vst [vmem:[%s155 + $0x8] sm:%s147] %v160
                %v162 = vld [vmem:[%s154 + $0x30] sm:%s147]
                %163 = vst [vmem:[%s155 + $0xc] sm:%s147] %v162
                %v164 = vld [vmem:[%s154 + $0x40] sm:%s147]
                %165 = vst [vmem:[%s155 + $0x10] sm:%s147] %v164
                %v166 = vld [vmem:[%s154 + $0x50] sm:%s147]
                %167 = vst [vmem:[%s155 + $0x14] sm:%s147] %v166
                %v168 = vld [vmem:[%s154 + $0x60] sm:%s147]
                %169 = vst [vmem:[%s155 + $0x18] sm:%s147] %v168
                %v170 = vld [vmem:[%s154 + $0x70] sm:%s147]
                %171 = vst [vmem:[%s155 + $0x1c] sm:%s147] %v170
                %v172 = vld [vmem:[%s154 + $0x80] sm:%s147]
                %173 = vst [vmem:[%s155 + $0x20] sm:%s147] %v172
                %v174 = vld [vmem:[%s154 + $0x90] sm:%s147]
                %175 = vst [vmem:[%s155 + $0x24] sm:%s147] %v174
                %v176 = vld [vmem:[%s154 + $0xa0] sm:%s147]
                %177 = vst [vmem:[%s155 + $0x28] sm:%s147] %v176
                %v178 = vld [vmem:[%s154 + $0xb0] sm:%s147]
                %179 = vst [vmem:[%s155 + $0x2c] sm:%s147] %v178
                %v180 = vld [vmem:[%s154 + $0xc0] sm:%s147]
                %181 = vst [vmem:[%s155 + $0x30] sm:%s147] %v180
                %v182 = vld [vmem:[%s154 + $0xd0] sm:%s147]
                %183 = vst [vmem:[%s155 + $0x34] sm:%s147] %v182
                %v184 = vld [vmem:[%s154 + $0xe0] sm:%s147]
                %185 = vst [vmem:[%s155 + $0x38] sm:%s147] %v184
                %v186 = vld [vmem:[%s154 + $0xf0] sm:%s147]
                %187 = vst [vmem:[%s155 + $0x3c] sm:%s147] %v186
              $region41: #{resnet2d_forward.4} parent=35 // loop_footer
                %s153 = sadd.s32 1, %s149
              $region42: #{resnet2d_forward.4} parent=35 // loop_footer_branch
                %148 = sbr.rel target = $region38
              $region43: #{resnet2d_forward.4} parent=35 // loop_exit
                _
            $region36: #{resnet2d_forward.4} parent=27 // pred_fallthru
              _
          $region28: #{resnet2d_forward.4} parent=23 // pred_fallthru
            _
          %240 = vnop
        $region24: #{resnet2d_forward.4} parent=19 // pred_fallthru
          _
      $region20: #{resnet2d_forward.4} parent=5 // pred_fallthru
        _
      %p241 = scmp.le.s32.totalorder 1, %s10
      %p242 = scmp.lt.s32.totalorder %s10, 5
      %p243 = pnand %p241, %p242
      %p244 = pneg %p243
      // Predicated region
      $region62: #{resnet2d_forward.4} parent=5 // pred_check
        _
      $region63: #{resnet2d_forward.4} parent=5 // pred_check_branch
        %246 = sbr.rel (%p243) target = $region65
      $region64: #{resnet2d_forward.4} parent=5 // pred_region
        %s247 = ssub.s32 %s10, 1
        %s248 = sand.u32 %s44, 1
        %s249 = sand.u32 %s44, 1
        %s250 = smul.addr %s249, 64
        %s251 = scalar_lea.vmem [#allocation2], %s250
        // Predicated region
        $region66: #{resnet2d_forward.4} parent=64 // pred_check
          %p252 = pneg %p57
        $region67: #{resnet2d_forward.4} parent=64 // pred_check_branch
          %254 = sbr.rel (%p252) target = $region69
        $region68: #{resnet2d_forward.4} parent=64 // pred_region
          _
        $region69: #{resnet2d_forward.4} parent=64 // pred_fallthru
          _
        %p255 = pneg %p31
        %p256 = pneg %p28
        %s257 = sand.u32 %s44, 1
        %s258 = sand.u32 %s44, 1
        %s259 = smul.addr %s258, 64
        %s260 = scalar_lea.vmem [#allocation2], %s259
        %p261 = pneg %p57
        %p262 = pneg %p54
        %p263 = pneg %p83
        %p264 = pneg %p80
        %p265 = scmp.lt.s32.totalorder %s15, 3
        %s266 = scalar_select %p265, %s15, 3
        %s267 = smul.addr %s266, 2
        %s268 = scalar_lea.vmem %s2, %s267
        %p269 = pneg %p109
        %p270 = pneg %p106
        %p271 = scmp.lt.s32.totalorder %s15, 3
        %s272 = scalar_select %p271, %s15, 3
        %s273 = smul.addr %s272, 2
        %s274 = smul.addr %s273, 4
        %s275 = scalar_lea.vmem %s3, %s274
        %p276 = scmp.lt.s32.totalorder %s15, 3
        %s277 = scalar_select %p276, %s15, 3
        %s278 = smul.addr %s277, 2
        %s279 = scalar_lea.vmem %s2, %s278
        %p280 = scmp.lt.s32.totalorder %s15, 3
        %s281 = scalar_select %p280, %s15, 3
        %s282 = smul.addr %s281, 2
        %s283 = smul.addr %s282, 4
        %s284 = scalar_lea.vmem %s3, %s283
        %v285 = vld [vmem:[%s0] sm:$0x3]
        %v286 = vld [vmem:[%s251] sm:$0xf]
        %v287 = vld [vmem:[%s251 + $0x4] sm:$0xf]
        %v288 = vld [vmem:[%s251 + $0x8] sm:$0xf]
        %v289 = vld [vmem:[%s251 + $0xc] sm:$0xf]
        %v290 = vld [vmem:[%s251 + $0x10] sm:$0xf]
        %v291 = vld [vmem:[%s251 + $0x14] sm:$0xf]
        %v292 = vld [vmem:[%s251 + $0x18] sm:$0xf]
        %v293 = vld [vmem:[%s251 + $0x1c] sm:$0xf]
        %v294 = vld [vmem:[%s251 + $0x20] sm:$0xf]
        %v295 = vld [vmem:[%s251 + $0x24] sm:$0xf]
        %v296 = vld [vmem:[%s251 + $0x28] sm:$0xf]
        %v297 = vld [vmem:[%s251 + $0x2c] sm:$0xf]
        %v298 = vld [vmem:[%s251 + $0x30] sm:$0xf]
        %v299 = vld [vmem:[%s251 + $0x34] sm:$0xf]
        %v300 = vld [vmem:[%s251 + $0x38] sm:$0xf]
        %v301 = vld [vmem:[%s251 + $0x3c] sm:$0xf]
        %v318 = vunpack.c.l.b16 %v286
        %v319 = vunpack.c.l.b16 %v287
        %v320 = vunpack.c.l.b16 %v288
        %v321 = vunpack.c.l.b16 %v289
        %v322 = vunpack.c.l.b16 %v290
        %v323 = vunpack.c.l.b16 %v291
        %v324 = vunpack.c.l.b16 %v292
        %v325 = vunpack.c.l.b16 %v293
        %v326 = vunpack.c.l.b16 %v294
        %v327 = vunpack.c.l.b16 %v295
        %v328 = vunpack.c.l.b16 %v296
        %v329 = vunpack.c.l.b16 %v297
        %v330 = vunpack.c.l.b16 %v298
        %v331 = vunpack.c.l.b16 %v299
        %v332 = vunpack.c.l.b16 %v300
        %v333 = vunpack.c.l.b16 %v301
        %v334 = vpack.c.b16 %v319, %v318
        %v335 = vpack.c.b16 %v321, %v320
        %v336 = vpack.c.b16 %v323, %v322
        %v337 = vpack.c.b16 %v325, %v324
        %v338 = vpack.c.b16 %v327, %v326
        %v339 = vpack.c.b16 %v329, %v328
        %v340 = vpack.c.b16 %v331, %v330
        %v341 = vpack.c.b16 %v333, %v332
        %350 = vmatpush.bf16.msra.mxu0 %v341
        %351 = vmatpush.bf16.msra.mxu0 %v340
        %352 = vmatpush.bf16.msra.mxu0 %v339
        %353 = vmatpush.bf16.msra.mxu0 %v338
        %354 = vmatpush.bf16.msra.mxu0 %v337
        %355 = vmatpush.bf16.msra.mxu0 %v336
        %356 = vmatpush.bf16.msra.mxu0 %v335
        %357 = vmatpush.bf16.msra.mxu0 %v334
        %358 = vmatmul.bf16.gmra.mxu0 %v285
        %v359 = vpop.f32.mrf.mxu0
        %v360 = vadd.f32 0.0, %v359
        %v361 = vpop.f32.mrf.mxu0
        %362 = vdwg.mxu0
        %v363 = vpack.c.bf16 %v360, %v360
        %364 = vst [vmem:[%s279] sm:$0x3] %v363
        %vm365 = vcmask 1043456
        %v366 = vsel %vm365, %v360, 0.0
        %367 = vadd.xlane.f32.xlu0 %v366
        %v368 = vpop.xlane.xlu0 %367
        %369 = vst [vmem:[%s284] sm:$0xf] %v368
        %v370 = vmul.f32 %v360, %v360
        %v371 = vsel %vm365, %v370, 0.0
        %372 = vadd.xlane.f32.xlu0 %v371
        %v373 = vpop.xlane.xlu0 %372
        %s374 = scalar_lea.vmem %s284, 4
        %375 = vst [vmem:[%s374] sm:$0xf] %v373
        %p376 = scmp.lt.s32.totalorder %s15, 3
        %s377 = scalar_select %p376, %s15, 3
        %s378 = smul.addr %s377, 2
        %s379 = scalar_lea.vmem %s2, %s378
        %p380 = scmp.lt.s32.totalorder %s15, 3
        %s381 = scalar_select %p380, %s15, 3
        %s382 = smul.addr %s381, 2
        %s383 = smul.addr %s382, 4
        %s384 = scalar_lea.vmem %s3, %s383
        // Predicated region
        $region70: #{resnet2d_forward.4} parent=64 // pred_check
          %p385 = pneg %p80
        $region71: #{resnet2d_forward.4} parent=64 // pred_check_branch
          %387 = sbr.rel (%p385) target = $region73
        $region72: #{resnet2d_forward.4} parent=64 // pred_region
          _
        $region73: #{resnet2d_forward.4} parent=64 // pred_fallthru
          _
        // Predicated region
        $region74: #{resnet2d_forward.4} parent=64 // pred_check
          %p388 = pneg %p106
        $region75: #{resnet2d_forward.4} parent=64 // pred_check_branch
          %390 = sbr.rel (%p388) target = $region77
        $region76: #{resnet2d_forward.4} parent=64 // pred_region
          _
        $region77: #{resnet2d_forward.4} parent=64 // pred_fallthru
          _
      $region65: #{resnet2d_forward.4} parent=5 // pred_fallthru
        _
      %p391 = scmp.le.s32.totalorder 2, %s10
      // Predicated region
      $region78: #{resnet2d_forward.4} parent=5 // pred_check
        %p392 = pneg %p391
      $region79: #{resnet2d_forward.4} parent=5 // pred_check_branch
        %394 = sbr.rel (%p392) target = $region81
      $region80: #{resnet2d_forward.4} parent=5 // pred_region
        %s395 = ssub.s32 %s10, 2
        // Predicated region
        $region82: #{resnet2d_forward.4} parent=80 // pred_check
          %p396 = pneg %p86
        $region83: #{resnet2d_forward.4} parent=80 // pred_check_branch
          %398 = sbr.rel (%p396) target = $region85
        $region84: #{resnet2d_forward.4} parent=80 // pred_region
          %p399 = scmp.lt.s32.totalorder %s16, 3
          %s400 = scalar_select %p399, %s16, 3
          %s401 = smul.addr %s400, 2
          %s402 = scalar_lea.vmem %s2, %s401
        $region85: #{resnet2d_forward.4} parent=80 // pred_fallthru
          _
        // Predicated region
        $region86: #{resnet2d_forward.4} parent=80 // pred_check
          %p403 = pneg %p112
        $region87: #{resnet2d_forward.4} parent=80 // pred_check_branch
          %405 = sbr.rel (%p403) target = $region89
        $region88: #{resnet2d_forward.4} parent=80 // pred_region
          %p406 = scmp.lt.s32.totalorder %s16, 3
          %s407 = scalar_select %p406, %s16, 3
          %s408 = smul.addr %s407, 2
          %s409 = smul.addr %s408, 4
          %s410 = scalar_lea.vmem %s3, %s409
        $region89: #{resnet2d_forward.4} parent=80 // pred_fallthru
          _
      $region81: #{resnet2d_forward.4} parent=5 // pred_fallthru
        _
    $region6: #{resnet2d_forward.4} parent=1 // loop_footer
      %s14 = sadd.s32 1, %s10
    $region7: #{resnet2d_forward.4} parent=1 // loop_footer_branch
      %9 = sbr.rel target = $region3
    $region8: #{resnet2d_forward.4} parent=1 // loop_exit
      _

// kernel: resnet2d_forward.6
$region0: #{resnet2d_forward.6}
  #allocation0 [shape = 'u32[]', space=smem, size = 0x4, offset = 0x4, fixed_abs, tag = 'smem constant byte address 0x4 - core index']
  #allocation1 [shape = 'u32[72,128]{1,0:T(1,128)}', space=vmem, size = 0x9000, scoped, tag = 'internal scratch']
  %s0 = inlined_call_operand.vmem [shape: bf16[8,128], index: 0, kind: input, shape index: {}]
  %s1 = inlined_call_operand.vmem [shape: bf16[128,128], index: 1, kind: input, shape index: {}]
  %s2 = inlined_call_operand.vmem [shape: bf16[8,128], index: 2, kind: input, shape index: {}]
  %s3 = inlined_call_operand.vmem [shape: bf16[128,128], index: 3, kind: input, shape index: {}]
  %s4 = inlined_call_operand.vmem [shape: bf16[8,128], index: 4, kind: output, shape index: {0}]
  %s5 = inlined_call_operand.vmem [shape: bf16[8,128], index: 5, kind: output, shape index: {1}]
  %s6 = inlined_call_operand.vmem [shape: f32[1,2,8,128], index: 6, kind: output, shape index: {2}]
  %s7 = inlined_call_operand.vmem [shape: f32[1,2,8,128], index: 7, kind: output, shape index: {3}]
  %8 = xla_tuple %s4, %s5, %s6, %s7
  %s9 = sld [smem:[#allocation0]]
  $region50: #{resnet2d_forward.6} parent=0
    _
  %s11 = ssub.s32 1, %s9
  %s12 = scalar_select 0, %s11, %s9
  // Predicated region
  $region2: #{resnet2d_forward.6} parent=0 // pred_check
    _
  $region3: #{resnet2d_forward.6} parent=0 // pred_check_branch
    %14 = sbr.rel (0) target = $region5
  $region4: #{resnet2d_forward.6} parent=0 // pred_region
    _
  $region5: #{resnet2d_forward.6} parent=0 // pred_fallthru
    _
  // Predicated region
  $region6: #{resnet2d_forward.6} parent=0 // pred_check
    _
  $region7: #{resnet2d_forward.6} parent=0 // pred_check_branch
    %16 = sbr.rel (0) target = $region9
  $region8: #{resnet2d_forward.6} parent=0 // pred_region
    _
  $region9: #{resnet2d_forward.6} parent=0 // pred_fallthru
    _
  // Predicated region
  $region10: #{resnet2d_forward.6} parent=0 // pred_check
    _
  $region11: #{resnet2d_forward.6} parent=0 // pred_check_branch
    %18 = sbr.rel (0) target = $region13
  $region12: #{resnet2d_forward.6} parent=0 // pred_region
    _
  $region13: #{resnet2d_forward.6} parent=0 // pred_fallthru
    _
  // Predicated region
  $region14: #{resnet2d_forward.6} parent=0 // pred_check
    _
  $region15: #{resnet2d_forward.6} parent=0 // pred_check_branch
    %20 = sbr.rel (0) target = $region17
  $region16: #{resnet2d_forward.6} parent=0 // pred_region
    _
  $region17: #{resnet2d_forward.6} parent=0 // pred_fallthru
    _
  %v21 = vld [vmem:[%s0] sm:$0xf]
  %v22 = vld [vmem:[%s1] sm:$0xf]
  %v23 = vld [vmem:[%s1 + $0x4] sm:$0xf]
  %v24 = vld [vmem:[%s1 + $0x8] sm:$0xf]
  %v25 = vld [vmem:[%s1 + $0xc] sm:$0xf]
  %v26 = vld [vmem:[%s1 + $0x10] sm:$0xf]
  %v27 = vld [vmem:[%s1 + $0x14] sm:$0xf]
  %v28 = vld [vmem:[%s1 + $0x18] sm:$0xf]
  %v29 = vld [vmem:[%s1 + $0x1c] sm:$0xf]
  %v30 = vld [vmem:[%s1 + $0x20] sm:$0xf]
  %v31 = vld [vmem:[%s1 + $0x24] sm:$0xf]
  %v32 = vld [vmem:[%s1 + $0x28] sm:$0xf]
  %v33 = vld [vmem:[%s1 + $0x2c] sm:$0xf]
  %v34 = vld [vmem:[%s1 + $0x30] sm:$0xf]
  %v35 = vld [vmem:[%s1 + $0x34] sm:$0xf]
  %v36 = vld [vmem:[%s1 + $0x38] sm:$0xf]
  %v37 = vld [vmem:[%s1 + $0x3c] sm:$0xf]
  %v54 = vunpack.c.l.b16 %v22
  %v55 = vunpack.c.l.b16 %v23
  %v56 = vunpack.c.l.b16 %v24
  %v57 = vunpack.c.l.b16 %v25
  %v58 = vunpack.c.l.b16 %v26
  %v59 = vunpack.c.l.b16 %v27
  %v60 = vunpack.c.l.b16 %v28
  %v61 = vunpack.c.l.b16 %v29
  %v62 = vunpack.c.l.b16 %v30
  %v63 = vunpack.c.l.b16 %v31
  %v64 = vunpack.c.l.b16 %v32
  %v65 = vunpack.c.l.b16 %v33
  %v66 = vunpack.c.l.b16 %v34
  %v67 = vunpack.c.l.b16 %v35
  %v68 = vunpack.c.l.b16 %v36
  %v69 = vunpack.c.l.b16 %v37
  %v70 = vpack.c.b16 %v55, %v54
  %v71 = vpack.c.b16 %v57, %v56
  %v72 = vpack.c.b16 %v59, %v58
  %v73 = vpack.c.b16 %v61, %v60
  %v74 = vpack.c.b16 %v63, %v62
  %v75 = vpack.c.b16 %v65, %v64
  %v76 = vpack.c.b16 %v67, %v66
  %v77 = vpack.c.b16 %v69, %v68
  %86 = vmatpush.bf16.msra.mxu0 %v77
  %87 = vmatpush.bf16.msra.mxu0 %v76
  %88 = vmatpush.bf16.msra.mxu0 %v75
  %89 = vmatpush.bf16.msra.mxu0 %v74
  %90 = vmatpush.bf16.msra.mxu0 %v73
  %91 = vmatpush.bf16.msra.mxu0 %v72
  %92 = vmatpush.bf16.msra.mxu0 %v71
  %93 = vmatpush.bf16.msra.mxu0 %v70
  %94 = vmatmul.bf16.gmra.mxu0 %v21
  %v95 = vpop.f32.mrf.mxu0
  %v96 = vadd.f32 0.0, %v95
  %v97 = vpop.f32.mrf.mxu0
  %98 = vdwg.mxu0
  %v99 = vld [vmem:[%s2] sm:$0xf]
  %v100 = vld [vmem:[%s3] sm:$0xf]
  %v101 = vld [vmem:[%s3 + $0x4] sm:$0xf]
  %v102 = vld [vmem:[%s3 + $0x8] sm:$0xf]
  %v103 = vld [vmem:[%s3 + $0xc] sm:$0xf]
  %v104 = vld [vmem:[%s3 + $0x10] sm:$0xf]
  %v105 = vld [vmem:[%s3 + $0x14] sm:$0xf]
  %v106 = vld [vmem:[%s3 + $0x18] sm:$0xf]
  %v107 = vld [vmem:[%s3 + $0x1c] sm:$0xf]
  %v108 = vld [vmem:[%s3 + $0x20] sm:$0xf]
  %v109 = vld [vmem:[%s3 + $0x24] sm:$0xf]
  %v110 = vld [vmem:[%s3 + $0x28] sm:$0xf]
  %v111 = vld [vmem:[%s3 + $0x2c] sm:$0xf]
  %v112 = vld [vmem:[%s3 + $0x30] sm:$0xf]
  %v113 = vld [vmem:[%s3 + $0x34] sm:$0xf]
  %v114 = vld [vmem:[%s3 + $0x38] sm:$0xf]
  %v115 = vld [vmem:[%s3 + $0x3c] sm:$0xf]
  %v132 = vunpack.c.l.b16 %v100
  %v133 = vunpack.c.l.b16 %v101
  %v134 = vunpack.c.l.b16 %v102
  %v135 = vunpack.c.l.b16 %v103
  %v136 = vunpack.c.l.b16 %v104
  %v137 = vunpack.c.l.b16 %v105
  %v138 = vunpack.c.l.b16 %v106
  %v139 = vunpack.c.l.b16 %v107
  %v140 = vunpack.c.l.b16 %v108
  %v141 = vunpack.c.l.b16 %v109
  %v142 = vunpack.c.l.b16 %v110
  %v143 = vunpack.c.l.b16 %v111
  %v144 = vunpack.c.l.b16 %v112
  %v145 = vunpack.c.l.b16 %v113
  %v146 = vunpack.c.l.b16 %v114
  %v147 = vunpack.c.l.b16 %v115
  %v148 = vpack.c.b16 %v133, %v132
  %v149 = vpack.c.b16 %v135, %v134
  %v150 = vpack.c.b16 %v137, %v136
  %v151 = vpack.c.b16 %v139, %v138
  %v152 = vpack.c.b16 %v141, %v140
  %v153 = vpack.c.b16 %v143, %v142
  %v154 = vpack.c.b16 %v145, %v144
  %v155 = vpack.c.b16 %v147, %v146
  %164 = vmatpush.bf16.msra.mxu0 %v155
  %165 = vmatpush.bf16.msra.mxu0 %v154
  %166 = vmatpush.bf16.msra.mxu0 %v153
  %167 = vmatpush.bf16.msra.mxu0 %v152
  %168 = vmatpush.bf16.msra.mxu0 %v151
  %169 = vmatpush.bf16.msra.mxu0 %v150
  %170 = vmatpush.bf16.msra.mxu0 %v149
  %171 = vmatpush.bf16.msra.mxu0 %v148
  %172 = vmatmul.bf16.gmra.mxu0 %v99
  %v173 = vpop.f32.mrf.mxu0
  %v174 = vadd.f32 0.0, %v173
  %v175 = vpop.f32.mrf.mxu0
  %176 = vdwg.mxu0
  %v177 = vpack.c.bf16 %v96, %v96
  %178 = vst [vmem:[%s4] sm:$0xf] %v177
  %v179 = vpack.c.bf16 %v174, %v174
  %180 = vst [vmem:[%s5] sm:$0xf] %v179
  %181 = vadd.xlane.f32.xlu0 %v96
  %v182 = vpop.xlane.xlu0 %181
  %183 = vst [vmem:[%s6] sm:$0xff] %v182
  %v184 = vmul.f32 %v96, %v96
  %185 = vadd.xlane.f32.xlu0 %v184
  %v186 = vpop.xlane.xlu0 %185
  %s187 = scalar_lea.vmem %s6, 8
  %188 = vst [vmem:[%s187] sm:$0xff] %v186
  %189 = vadd.xlane.f32.xlu0 %v174
  %v190 = vpop.xlane.xlu0 %189
  %191 = vst [vmem:[%s7] sm:$0xff] %v190
  %v192 = vmul.f32 %v174, %v174
  %193 = vadd.xlane.f32.xlu0 %v192
  %v194 = vpop.xlane.xlu0 %193
  %s195 = scalar_lea.vmem %s7, 8
  %196 = vst [vmem:[%s195] sm:$0xff] %v194
  // Predicated region
  $region18: #{resnet2d_forward.6} parent=0 // pred_check
    _
  $region19: #{resnet2d_forward.6} parent=0 // pred_check_branch
    %198 = sbr.rel (0) target = $region21
  $region20: #{resnet2d_forward.6} parent=0 // pred_region
    _
  $region21: #{resnet2d_forward.6} parent=0 // pred_fallthru
    _
  // Predicated region
  $region22: #{resnet2d_forward.6} parent=0 // pred_check
    _
  $region23: #{resnet2d_forward.6} parent=0 // pred_check_branch
    %200 = sbr.rel (0) target = $region25
  $region24: #{resnet2d_forward.6} parent=0 // pred_region
    _
  $region25: #{resnet2d_forward.6} parent=0 // pred_fallthru
    _
  // Predicated region
  $region26: #{resnet2d_forward.6} parent=0 // pred_check
    _
  $region27: #{resnet2d_forward.6} parent=0 // pred_check_branch
    %202 = sbr.rel (0) target = $region29
  $region28: #{resnet2d_forward.6} parent=0 // pred_region
    _
  $region29: #{resnet2d_forward.6} parent=0 // pred_fallthru
    _
  // Predicated region
  $region30: #{resnet2d_forward.6} parent=0 // pred_check
    _
  $region31: #{resnet2d_forward.6} parent=0 // pred_check_branch
    %204 = sbr.rel (0) target = $region33
  $region32: #{resnet2d_forward.6} parent=0 // pred_region
    _
  $region33: #{resnet2d_forward.6} parent=0 // pred_fallthru
    _
  // Predicated region
  $region34: #{resnet2d_forward.6} parent=0 // pred_check
    _
  $region35: #{resnet2d_forward.6} parent=0 // pred_check_branch
    %206 = sbr.rel (0) target = $region37
  $region36: #{resnet2d_forward.6} parent=0 // pred_region
    _
  $region37: #{resnet2d_forward.6} parent=0 // pred_fallthru
    _
  // Predicated region
  $region38: #{resnet2d_forward.6} parent=0 // pred_check
    _
  $region39: #{resnet2d_forward.6} parent=0 // pred_check_branch
    %208 = sbr.rel (0) target = $region41
  $region40: #{resnet2d_forward.6} parent=0 // pred_region
    _
  $region41: #{resnet2d_forward.6} parent=0 // pred_fallthru
    _
  // Predicated region
  $region42: #{resnet2d_forward.6} parent=0 // pred_check
    _
  $region43: #{resnet2d_forward.6} parent=0 // pred_check_branch
    %210 = sbr.rel (0) target = $region45
  $region44: #{resnet2d_forward.6} parent=0 // pred_region
    _
  $region45: #{resnet2d_forward.6} parent=0 // pred_fallthru
    _
  // Predicated region
  $region46: #{resnet2d_forward.6} parent=0 // pred_check
    _
  $region47: #{resnet2d_forward.6} parent=0 // pred_check_branch
    %212 = sbr.rel (0) target = $region49
  $region48: #{resnet2d_forward.6} parent=0 // pred_region
    _
  $region49: #{resnet2d_forward.6} parent=0 // pred_fallthru
    _

// kernel: resnet2d_forward.7
$region0: #{resnet2d_forward.7}
  #allocation0 [shape = 'u32[]', space=smem, size = 0x4, offset = 0x4, fixed_abs, tag = 'smem constant byte address 0x4 - core index']
  #allocation1 [shape = 'u32[72,128]{1,0:T(1,128)}', space=vmem, size = 0x9000, scoped, tag = 'internal scratch']
  %s0 = inlined_call_operand.vmem [shape: bf16[8,128], index: 0, kind: input, shape index: {}]
  %s1 = inlined_call_operand.vmem [shape: bf16[8,128], index: 1, kind: input, shape index: {}]
  %s2 = inlined_call_operand.vmem [shape: f32[8,1], index: 2, kind: input, shape index: {}]
  %s3 = inlined_call_operand.vmem [shape: f32[8,1], index: 3, kind: input, shape index: {}]
  %s4 = inlined_call_operand.vmem [shape: f32[8,1], index: 4, kind: input, shape index: {}]
  %s5 = inlined_call_operand.vmem [shape: f32[8,128], index: 5, kind: output, shape index: {}]
  %s6 = sld [smem:[#allocation0]]
  $region30: #{resnet2d_forward.7} parent=0
    _
  %s8 = ssub.s32 1, %s6
  %s9 = scalar_select 0, %s8, %s6
  // Predicated region
  $region2: #{resnet2d_forward.7} parent=0 // pred_check
    _
  $region3: #{resnet2d_forward.7} parent=0 // pred_check_branch
    %11 = sbr.rel (0) target = $region5
  $region4: #{resnet2d_forward.7} parent=0 // pred_region
    _
  $region5: #{resnet2d_forward.7} parent=0 // pred_fallthru
    _
  // Predicated region
  $region6: #{resnet2d_forward.7} parent=0 // pred_check
    _
  $region7: #{resnet2d_forward.7} parent=0 // pred_check_branch
    %13 = sbr.rel (0) target = $region9
  $region8: #{resnet2d_forward.7} parent=0 // pred_region
    _
  $region9: #{resnet2d_forward.7} parent=0 // pred_fallthru
    _
  // Predicated region
  $region10: #{resnet2d_forward.7} parent=0 // pred_check
    _
  $region11: #{resnet2d_forward.7} parent=0 // pred_check_branch
    %15 = sbr.rel (0) target = $region13
  $region12: #{resnet2d_forward.7} parent=0 // pred_region
    _
  $region13: #{resnet2d_forward.7} parent=0 // pred_fallthru
    _
  // Predicated region
  $region14: #{resnet2d_forward.7} parent=0 // pred_check
    _
  $region15: #{resnet2d_forward.7} parent=0 // pred_check_branch
    %17 = sbr.rel (0) target = $region17
  $region16: #{resnet2d_forward.7} parent=0 // pred_region
    _
  $region17: #{resnet2d_forward.7} parent=0 // pred_fallthru
    _
  // Predicated region
  $region18: #{resnet2d_forward.7} parent=0 // pred_check
    _
  $region19: #{resnet2d_forward.7} parent=0 // pred_check_branch
    %19 = sbr.rel (0) target = $region21
  $region20: #{resnet2d_forward.7} parent=0 // pred_region
    _
  $region21: #{resnet2d_forward.7} parent=0 // pred_fallthru
    _
  %v20 = vld [vmem:[%s0] sm:$0xf]
  %v21 = vunpack.c.l.bf16 %v20
  %v22 = vld [vmem:[%s2] sm:$0xff]
  %24 = vset.pattern.permute.xlu0 0
  %25 = vperm.xlu0 %24, %v22
  %v26 = vpop.permute.xlu0 %25
  %v28 = vmul.f32 %v21, %v26
  %v29 = vld [vmem:[%s1] sm:$0xf]
  %v30 = vunpack.c.l.bf16 %v29
  %v31 = vld [vmem:[%s3] sm:$0xff]
  %33 = vset.pattern.permute.xlu0 0
  %34 = vperm.xlu0 %33, %v31
  %v35 = vpop.permute.xlu0 %34
  %v37 = vmul.f32 %v30, %v35
  %v38 = vadd.f32 %v28, %v37
  %v39 = vld [vmem:[%s4] sm:$0xff]
  %41 = vset.pattern.permute.xlu0 0
  %42 = vperm.xlu0 %41, %v39
  %v43 = vpop.permute.xlu0 %42
  %v45 = vadd.f32 %v38, %v43
  %v46 = vmul.f32 %v45, 0.3
  %v47 = vmax.f32 %v45, %v46
  %48 = vst [vmem:[%s5] sm:$0xff] %v47
  // Predicated region
  $region22: #{resnet2d_forward.7} parent=0 // pred_check
    _
  $region23: #{resnet2d_forward.7} parent=0 // pred_check_branch
    %50 = sbr.rel (0) target = $region25
  $region24: #{resnet2d_forward.7} parent=0 // pred_region
    _
  $region25: #{resnet2d_forward.7} parent=0 // pred_fallthru
    _
  // Predicated region
  $region26: #{resnet2d_forward.7} parent=0 // pred_check
    _
  $region27: #{resnet2d_forward.7} parent=0 // pred_check_branch
    %52 = sbr.rel (0) target = $region29
  $region28: #{resnet2d_forward.7} parent=0 // pred_region
    _
  $region29: #{resnet2d_forward.7} parent=0 // pred_fallthru
    _

</llo_original>
